<compile_context>
chip_gen: v7x
topology: tpu7x:2x2x1
jax: 0.10.0
libtpu: 0.0.40
codegen_flags: <defaults>
</compile_context>

<pallas_src>
import functools

import jax
import jax.numpy as jnp
from jax import lax
from jax.experimental import pallas as pl
from jax.experimental.pallas import tpu as pltpu

LEAKY_SLOPE = 0.01
TK_FC = 512      # K (reduction) tile for the fc1 accumulation
H_PAD = 128      # lane-dense padded width for fc hidden / class dims


def _round_up(x, m):
    return ((x + m - 1) // m) * m


# ----------------------------- Pallas kernels ------------------------------

def _linear_act_kernel(x_ref, w_ref, b_ref, o_ref):
    """o = leaky_relu(x @ w + b); one (tm, K) row tile per grid step (conv-as-matmul)."""
    y = jnp.dot(x_ref[...], w_ref[...], preferred_element_type=jnp.float32)
    y = y + b_ref[...]
    o_ref[...] = jnp.where(y >= 0, y, LEAKY_SLOPE * y)


def _maxpool4_kernel(x_ref, o_ref):
    # x_ref: (4, tm, C) -- the 4 elements of each 2x2 pooling window.
    o_ref[...] = jnp.maximum(jnp.maximum(x_ref[0], x_ref[1]),
                             jnp.maximum(x_ref[2], x_ref[3]))


def _fc_head_kernel(x_ref, w1_ref, b1_ref, w2_ref, b2_ref, w3_ref, b3_ref,
                    o_ref, acc_ref, *, num_classes):
    """Fused fc1 (K-tiled accumulation) -> leaky -> fc2 -> leaky -> fc3 -> log_softmax."""
    k = pl.program_id(1)

    @pl.when(k == 0)
    def _():
        acc_ref[...] = jnp.zeros_like(acc_ref)

    acc_ref[...] += jnp.dot(x_ref[...], w1_ref[...],
                            preferred_element_type=jnp.float32)

    @pl.when(k == pl.num_programs(1) - 1)
    def _():
        h = acc_ref[...] + b1_ref[...]
        h = jnp.where(h >= 0, h, LEAKY_SLOPE * h)
        h = jnp.dot(h, w2_ref[...], preferred_element_type=jnp.float32) + b2_ref[...]
        h = jnp.where(h >= 0, h, LEAKY_SLOPE * h)
        logits = jnp.dot(h, w3_ref[...], preferred_element_type=jnp.float32) + b3_ref[...]
        # mask the padded class lanes before the softmax
        col = lax.broadcasted_iota(jnp.int32, logits.shape, 1)
        logits = jnp.where(col < num_classes, logits, jnp.float32(-1e30))
        m = jnp.max(logits, axis=-1, keepdims=True)
        lse = jnp.log(jnp.sum(jnp.exp(logits - m), axis=-1, keepdims=True)) + m
        o_ref[...] = logits - lse


# ------------------------------ Pallas wrappers -----------------------------

def pallas_linear_act(x, w, b2d, *, tm=1024):
    """leaky_relu(x @ w + b). x:(M,K) w:(K,N) b2d:(1,N). M padded to a row-tile multiple."""
    m, k = x.shape
    _, n = w.shape
    tm_eff = min(tm, _round_up(m, 8))
    m_pad = _round_up(m, tm_eff)
    xp = jnp.pad(x, ((0, m_pad - m), (0, 0)))
    out = pl.pallas_call(
        _linear_act_kernel,
        out_shape=jax.ShapeDtypeStruct((m_pad, n), jnp.float32),
        grid=(m_pad // tm_eff,),
        in_specs=[pl.BlockSpec((tm_eff, k), lambda i: (i, 0)),
                  pl.BlockSpec((k, n), lambda i: (0, 0)),
                  pl.BlockSpec((1, n), lambda i: (0, 0))],
        out_specs=pl.BlockSpec((tm_eff, n), lambda i: (i, 0)),
        compiler_params=pltpu.CompilerParams(dimension_semantics=("parallel",)),
    )(xp, w, b2d)
    return out[:m]


def pallas_maxpool2x2(x_nhwc, *, tm=1024):
    """2x2 / stride-2 max pool (floor semantics, like F.max_pool2d), tiled over rows."""
    n, h, w, c = x_nhwc.shape
    hp, wp = h // 2, w // 2
    x = x_nhwc[:, :2 * hp, :2 * wp, :]                                # crop (floor) -- glue
    x = x.reshape(n, hp, 2, wp, 2, c)
    x = jnp.transpose(x, (2, 4, 0, 1, 3, 5)).reshape(4, n * hp * wp, c)  # glue rearrange
    m = n * hp * wp
    tm_eff = min(tm, _round_up(m, 8))
    m_pad = _round_up(m, tm_eff)
    x = jnp.pad(x, ((0, 0), (0, m_pad - m), (0, 0)))
    out = pl.pallas_call(
        _maxpool4_kernel,
        out_shape=jax.ShapeDtypeStruct((m_pad, c), jnp.float32),
        grid=(m_pad // tm_eff,),
        in_specs=[pl.BlockSpec((4, tm_eff, c), lambda i: (0, i, 0))],
        out_specs=pl.BlockSpec((tm_eff, c), lambda i: (i, 0)),
        compiler_params=pltpu.CompilerParams(dimension_semantics=("parallel",)),
    )(x)
    return out[:m].reshape(n, hp, wp, c)


def _im2col(x_nhwc_padded, k):
    n, h, w, c = x_nhwc_padded.shape
    ho, wo = h - k + 1, w - k + 1
    patches = [x_nhwc_padded[:, i:i + ho, j:j + wo, :]
               for i in range(k) for j in range(k)]
    cols = jnp.stack(patches, axis=3)                       # (N, Ho, Wo, k*k, C)
    return cols.reshape(n * ho * wo, k * k * c), (ho, wo)


def pallas_conv2d_leaky(x_nhwc, wcol, b2d, *, ksize, padding):
    """Cross-correlation conv (PyTorch semantics) + bias + leaky_relu via tiled matmul."""
    n = x_nhwc.shape[0]
    cout = wcol.shape[1]
    xp = jnp.pad(x_nhwc, ((0, 0), (padding, padding), (padding, padding), (0, 0)))
    cols, (ho, wo) = _im2col(xp, ksize)                     # glue: indexing/reshape only
    y = pallas_linear_act(cols, wcol, b2d)                  # matmul hot path in Pallas
    return y.reshape(n, ho, wo, cout)


def pallas_fc_head(x_flat, pp, *, num_classes):
    """Fused fc1 -> fc2 -> fc3 -> log_softmax. x_flat:(M, flat) in NHWC-flatten order."""
    m, kdim = x_flat.shape
    k_pad = pp["fc1_w"].shape[0]                # multiple of TK_FC (from prepare_params)
    tm = min(128, _round_up(m, 8))
    m_pad = _round_up(m, tm)
    xp = jnp.pad(x_flat, ((0, m_pad - m), (0, k_pad - kdim)))
    kern = functools.partial(_fc_head_kernel, num_classes=num_classes)
    out = pl.pallas_call(
        kern,
        out_shape=jax.ShapeDtypeStruct((m_pad, H_PAD), jnp.float32),
        grid=(m_pad // tm, k_pad // TK_FC),
        in_specs=[
            pl.BlockSpec((tm, TK_FC), lambda i, j: (i, j)),       # x        (K-tiled)
            pl.BlockSpec((TK_FC, H_PAD), lambda i, j: (j, 0)),    # fc1_w    (K-tiled)
            pl.BlockSpec((1, H_PAD), lambda i, j: (0, 0)),        # fc1_b
            pl.BlockSpec((H_PAD, H_PAD), lambda i, j: (0, 0)),    # fc2_w    (resident)
            pl.BlockSpec((1, H_PAD), lambda i, j: (0, 0)),        # fc2_b
            pl.BlockSpec((H_PAD, H_PAD), lambda i, j: (0, 0)),    # fc3_w    (resident)
            pl.BlockSpec((1, H_PAD), lambda i, j: (0, 0)),        # fc3_b
        ],
        out_specs=pl.BlockSpec((tm, H_PAD), lambda i, j: (i, 0)),
        scratch_shapes=[pltpu.VMEM((tm, H_PAD), jnp.float32)],
        compiler_params=pltpu.CompilerParams(
            dimension_semantics=("parallel", "arbitrary")),
    )(xp, pp["fc1_w"], pp["fc1_b"], pp["fc2_w"], pp["fc2_b"],
      pp["fc3_w"], pp["fc3_b"])
    return out[:m, :num_classes]


# -------------------------------- model -------------------------------------

def init_params(key, image_dim=16, num_classes=7):
    """PyTorch-style parameters (conv OIHW; fc weights stored (in,out), CHW row order)."""
    temp = int(((image_dim + 2) / 2 + 2) / 2)
    flat = temp * temp * 16

    def nrm(k, shape, scale):
        return (scale * jax.random.normal(k, shape)).astype(jnp.float32)

    ks = jax.random.split(key, 10)
    params = {
        "conv1_w": nrm(ks[0], (12, 1, 3, 3), 0.1),
        "conv1_b": nrm(ks[1], (12,), 0.1),
        "conv2_w": nrm(ks[2], (16, 12, 3, 3), 0.1),
        "conv2_b": nrm(ks[3], (16,), 0.1),
        "fc1_w": nrm(ks[4], (flat, 120), 0.05),
        "fc1_b": nrm(ks[5], (120,), 0.05),
        "fc2_w": nrm(ks[6], (120, 90), 0.05),
        "fc2_b": nrm(ks[7], (90,), 0.05),
        "fc3_w": nrm(ks[8], (90, num_classes), 0.05),
        "fc3_b": nrm(ks[9], (num_classes,), 0.05),
    }
    return params, temp


def prepare_params(p, temp):
    """One-time repack of the PyTorch-style params into kernel-ready form."""
    cout2 = p["conv2_w"].shape[0]                 # 16
    flat = temp * temp * cout2

    def pad_to(a, rows, cols):
        return jnp.pad(a, ((0, rows - a.shape[0]), (0, cols - a.shape[1])))

    # conv weights -> im2col matmul form (kh*kw*cin, cout)
    conv1_wcol = jnp.transpose(p["conv1_w"], (2, 3, 1, 0)).reshape(-1, p["conv1_w"].shape[0])
    conv2_wcol = jnp.transpose(p["conv2_w"], (2, 3, 1, 0)).reshape(-1, cout2)

    # fold PyTorch's (C,H,W)-order flatten into the fc1 weight: reorder rows to (H,W,C)
    perm = jnp.transpose(jnp.arange(flat).reshape(cout2, temp, temp), (1, 2, 0)).reshape(-1)
    fc1_w = p["fc1_w"][perm]
    k_pad = _round_up(flat, TK_FC)

    return {
        "conv1_wcol": conv1_wcol, "conv1_b": p["conv1_b"].reshape(1, -1),
        "conv2_wcol": conv2_wcol, "conv2_b": p["conv2_b"].reshape(1, -1),
        "fc1_w": pad_to(fc1_w, k_pad, H_PAD),
        "fc1_b": pad_to(p["fc1_b"].reshape(1, -1), 1, H_PAD),
        "fc2_w": pad_to(p["fc2_w"], H_PAD, H_PAD),
        "fc2_b": pad_to(p["fc2_b"].reshape(1, -1), 1, H_PAD),
        "fc3_w": pad_to(p["fc3_w"], H_PAD, H_PAD),
        "fc3_b": pad_to(p["fc3_b"].reshape(1, -1), 1, H_PAD),
    }


@functools.partial(jax.jit, static_argnames=("num_classes",))
def forward(pp, x_nchw, *, num_classes=7):
    """Pallas implementation of My_CNNMalware_Model1.forward. Input: NCHW float32."""
    n = x_nchw.shape[0]
    x = jnp.transpose(x_nchw, (0, 2, 3, 1)).astype(jnp.float32)     # NCHW -> NHWC
    x = pallas_conv2d_leaky(x, pp["conv1_wcol"], pp["conv1_b"], ksize=3, padding=2)
    x = pallas_maxpool2x2(x)
    x = pallas_conv2d_leaky(x, pp["conv2_wcol"], pp["conv2_b"], ksize=3, padding=2)
    x = pallas_maxpool2x2(x)
    # NHWC flatten; the CHW->HWC reorder is pre-folded into fc1_w (prepare_params)
    x = x.reshape(n, -1)
    return pallas_fc_head(x, pp, num_classes=num_classes)


def reference_forward(params, x_nchw):
    """Pure-JAX reference (same math as the PyTorch module), default precision."""
    leak = lambda v: jnp.where(v >= 0, v, LEAKY_SLOPE * v)
    dn = ("NCHW", "OIHW", "NCHW")
    y = lax.conv_general_dilated(x_nchw, params["conv1_w"], (1, 1), ((2, 2), (2, 2)),
                                 dimension_numbers=dn)
    y = leak(y + params["conv1_b"][None, :, None, None])
    y = lax.reduce_window(y, -jnp.inf, lax.max, (1, 1, 2, 2), (1, 1, 2, 2), "VALID")
    y = lax.conv_general_dilated(y, params["conv2_w"], (1, 1), ((2, 2), (2, 2)),
                                 dimension_numbers=dn)
    y = leak(y + params["conv2_b"][None, :, None, None])
    y = lax.reduce_window(y, -jnp.inf, lax.max, (1, 1, 2, 2), (1, 1, 2, 2), "VALID")
    y = y.reshape(y.shape[0], -1)                                    # CHW-order flatten
    y = leak(jnp.dot(y, params["fc1_w"]) + params["fc1_b"])
    y = leak(jnp.dot(y, params["fc2_w"]) + params["fc2_b"])
    y = jnp.dot(y, params["fc3_w"]) + params["fc3_b"]
    return jax.nn.log_softmax(y, axis=-1)


if __name__ == "__main__":
    image_dim, batch, num_classes = 16, 2, 7     # small shapes; module default is 256
    key = jax.random.PRNGKey(0)
    kp, kx = jax.random.split(key)
    params, temp = init_params(kp, image_dim=image_dim, num_classes=num_classes)
    pallas_params = prepare_params(params, temp)
    x = jax.random.normal(kx, (batch, 1, image_dim, image_dim), jnp.float32)

    out = jax.block_until_ready(forward(pallas_params, x, num_classes=num_classes))
    ref = jax.block_until_ready(reference_forward(params, x))

    assert out.shape == (batch, num_classes)
    assert bool(jnp.all(jnp.isfinite(out)))
    assert bool(jnp.allclose(jnp.sum(jnp.exp(out), axis=1), 1.0, atol=1e-4))
    assert bool(jnp.allclose(out, ref, atol=1e-2, rtol=1e-2))
    print("KERNEL_OK")
</pallas_src>

<mosaic_0001>
module attributes {stable_mosaic.version = 11 : i64} {
  func.func @_linear_act_kernel(%arg0: i32, %arg1: memref<648x9xf32, #tpu.memory_space<vmem>>, %arg2: memref<9x12xf32, #tpu.memory_space<vmem>>, %arg3: memref<1x12xf32, #tpu.memory_space<vmem>>, %arg4: memref<648x12xf32, #tpu.memory_space<vmem>>) attributes {dimension_semantics = [#tpu.dimension_semantics<parallel>], iteration_bounds = array<i64: 1>, scalar_prefetch = 0 : i64, scratch_operands = 0 : i64, tpu.core_type = #tpu.core_type<tc>, window_params = [{transform_indices = @transform_0, window_bounds = array<i64: 648, 9>}, {pipeline_mode = #tpu.pipeline_mode<synchronous>, transform_indices = @transform_1, window_bounds = array<i64: 9, 12>}, {pipeline_mode = #tpu.pipeline_mode<synchronous>, transform_indices = @transform_2, window_bounds = array<i64: 1, 12>}, {transform_indices = @transform_3, window_bounds = array<i64: 648, 12>}]} {
    %c0 = arith.constant 0 : index
    %c0_0 = arith.constant 0 : index
    %0 = vector.load %arg1[%c0, %c0_0] : memref<648x9xf32, #tpu.memory_space<vmem>>, vector<648x9xf32>
    %c0_1 = arith.constant 0 : index
    %c0_2 = arith.constant 0 : index
    %1 = vector.load %arg2[%c0_1, %c0_2] : memref<9x12xf32, #tpu.memory_space<vmem>>, vector<9x12xf32>
    %cst = arith.constant dense<0.000000e+00> : vector<648x12xf32>
    %2 = tpu.matmul %0, %1, %cst {dimension_numbers = #tpu.dot_dimension_numbers<[1], [0], [0], [1], [0, 0, 1, 1], [], []>} : vector<648x9xf32>, vector<9x12xf32>, vector<648x12xf32> -> vector<648x12xf32>
    %c0_3 = arith.constant 0 : index
    %c0_4 = arith.constant 0 : index
    %3 = vector.load %arg3[%c0_3, %c0_4] : memref<1x12xf32, #tpu.memory_space<vmem>>, vector<1x12xf32>
    %4 = vector.broadcast %3 : vector<1x12xf32> to vector<648x12xf32>
    %5 = arith.addf %2, %4 : vector<648x12xf32>
    %cst_5 = arith.constant 0.000000e+00 : f32
    %6 = vector.broadcast %cst_5 : f32 to vector<648x12xf32>
    %7 = arith.cmpf oge, %5, %6 : vector<648x12xf32>
    %cst_6 = arith.constant 0.00999999977 : f32
    %8 = vector.broadcast %cst_6 : f32 to vector<648x12xf32>
    %9 = arith.mulf %8, %5 : vector<648x12xf32>
    %10 = arith.select %7, %5, %9 : vector<648x12xi1>, vector<648x12xf32>
    %c0_7 = arith.constant 0 : index
    %c0_8 = arith.constant 0 : index
    %11 = vector.load %arg4[%c0_7, %c0_8] : memref<648x12xf32, #tpu.memory_space<vmem>>, vector<648x12xf32>
    tpu.vector_store %arg4[%c0_7, %c0_8], %10 {strides = array<i32>} : memref<648x12xf32, #tpu.memory_space<vmem>>, vector<648x12xf32>,
    return
  }
  func.func @transform_0(%arg0: i32) -> (i32, i32) {
    %c0_i32 = arith.constant 0 : i32
    %c0_i32_0 = arith.constant 0 : i32
    return %arg0, %c0_i32 : i32, i32
  }
  func.func @transform_1(%arg0: i32) -> (i32, i32) {
    %c0_i32 = arith.constant 0 : i32
    %c0_i32_0 = arith.constant 0 : i32
    %c0_i32_1 = arith.constant 0 : i32
    return %c0_i32, %c0_i32_0 : i32, i32
  }
  func.func @transform_2(%arg0: i32) -> (i32, i32) {
    %c0_i32 = arith.constant 0 : i32
    %c0_i32_0 = arith.constant 0 : i32
    %c0_i32_1 = arith.constant 0 : i32
    return %c0_i32, %c0_i32_0 : i32, i32
  }
  func.func @transform_3(%arg0: i32) -> (i32, i32) {
    %c0_i32 = arith.constant 0 : i32
    %c0_i32_0 = arith.constant 0 : i32
    return %arg0, %c0_i32 : i32, i32
  }
}

module attributes {stable_mosaic.version = 11 : i64} {
  func.func @_maxpool4_kernel(%arg0: i32, %arg1: memref<4x168x12xf32, #tpu.memory_space<vmem>>, %arg2: memref<168x12xf32, #tpu.memory_space<vmem>>) attributes {dimension_semantics = [#tpu.dimension_semantics<parallel>], iteration_bounds = array<i64: 1>, scalar_prefetch = 0 : i64, scratch_operands = 0 : i64, tpu.core_type = #tpu.core_type<tc>, window_params = [{transform_indices = @transform_0, window_bounds = array<i64: 4, 168, 12>}, {transform_indices = @transform_1, window_bounds = array<i64: 168, 12>}]} {
    %c0 = arith.constant 0 : index
    %c0_0 = arith.constant 0 : index
    %c0_1 = arith.constant 0 : index
    %0 = vector.load %arg1[%c0, %c0_0, %c0_1] : memref<4x168x12xf32, #tpu.memory_space<vmem>>, vector<1x168x12xf32>
    %1 = vector.shape_cast %0 : vector<1x168x12xf32> to vector<168x12xf32>
    %c1 = arith.constant 1 : index
    %c0_2 = arith.constant 0 : index
    %c0_3 = arith.constant 0 : index
    %2 = vector.load %arg1[%c1, %c0_2, %c0_3] : memref<4x168x12xf32, #tpu.memory_space<vmem>>, vector<1x168x12xf32>
    %3 = vector.shape_cast %2 : vector<1x168x12xf32> to vector<168x12xf32>
    %4 = arith.maximumf %1, %3 : vector<168x12xf32>
    %c2 = arith.constant 2 : index
    %c0_4 = arith.constant 0 : index
    %c0_5 = arith.constant 0 : index
    %5 = vector.load %arg1[%c2, %c0_4, %c0_5] : memref<4x168x12xf32, #tpu.memory_space<vmem>>, vector<1x168x12xf32>
    %6 = vector.shape_cast %5 : vector<1x168x12xf32> to vector<168x12xf32>
    %c3 = arith.constant 3 : index
    %c0_6 = arith.constant 0 : index
    %c0_7 = arith.constant 0 : index
    %7 = vector.load %arg1[%c3, %c0_6, %c0_7] : memref<4x168x12xf32, #tpu.memory_space<vmem>>, vector<1x168x12xf32>
    %8 = vector.shape_cast %7 : vector<1x168x12xf32> to vector<168x12xf32>
    %9 = arith.maximumf %6, %8 : vector<168x12xf32>
    %10 = arith.maximumf %4, %9 : vector<168x12xf32>
    %c0_8 = arith.constant 0 : index
    %c0_9 = arith.constant 0 : index
    %11 = vector.load %arg2[%c0_8, %c0_9] : memref<168x12xf32, #tpu.memory_space<vmem>>, vector<168x12xf32>
    tpu.vector_store %arg2[%c0_8, %c0_9], %10 {strides = array<i32>} : memref<168x12xf32, #tpu.memory_space<vmem>>, vector<168x12xf32>,
    return
  }
  func.func @transform_0(%arg0: i32) -> (i32, i32, i32) {
    %c0_i32 = arith.constant 0 : i32
    %c0_i32_0 = arith.constant 0 : i32
    %c0_i32_1 = arith.constant 0 : i32
    return %c0_i32, %arg0, %c0_i32_0 : i32, i32, i32
  }
  func.func @transform_1(%arg0: i32) -> (i32, i32) {
    %c0_i32 = arith.constant 0 : i32
    %c0_i32_0 = arith.constant 0 : i32
    return %arg0, %c0_i32 : i32, i32
  }
}

module attributes {stable_mosaic.version = 11 : i64} {
  func.func @_linear_act_kernel(%arg0: i32, %arg1: memref<248x108xf32, #tpu.memory_space<vmem>>, %arg2: memref<108x16xf32, #tpu.memory_space<vmem>>, %arg3: memref<1x16xf32, #tpu.memory_space<vmem>>, %arg4: memref<248x16xf32, #tpu.memory_space<vmem>>) attributes {dimension_semantics = [#tpu.dimension_semantics<parallel>], iteration_bounds = array<i64: 1>, scalar_prefetch = 0 : i64, scratch_operands = 0 : i64, tpu.core_type = #tpu.core_type<tc>, window_params = [{transform_indices = @transform_0, window_bounds = array<i64: 248, 108>}, {pipeline_mode = #tpu.pipeline_mode<synchronous>, transform_indices = @transform_1, window_bounds = array<i64: 108, 16>}, {pipeline_mode = #tpu.pipeline_mode<synchronous>, transform_indices = @transform_2, window_bounds = array<i64: 1, 16>}, {transform_indices = @transform_3, window_bounds = array<i64: 248, 16>}]} {
    %c0 = arith.constant 0 : index
    %c0_0 = arith.constant 0 : index
    %0 = vector.load %arg1[%c0, %c0_0] : memref<248x108xf32, #tpu.memory_space<vmem>>, vector<248x108xf32>
    %c0_1 = arith.constant 0 : index
    %c0_2 = arith.constant 0 : index
    %1 = vector.load %arg2[%c0_1, %c0_2] : memref<108x16xf32, #tpu.memory_space<vmem>>, vector<108x16xf32>
    %cst = arith.constant dense<0.000000e+00> : vector<248x16xf32>
    %2 = tpu.matmul %0, %1, %cst {dimension_numbers = #tpu.dot_dimension_numbers<[1], [0], [0], [1], [0, 0, 1, 1], [], []>} : vector<248x108xf32>, vector<108x16xf32>, vector<248x16xf32> -> vector<248x16xf32>
    %c0_3 = arith.constant 0 : index
    %c0_4 = arith.constant 0 : index
    %3 = vector.load %arg3[%c0_3, %c0_4] : memref<1x16xf32, #tpu.memory_space<vmem>>, vector<1x16xf32>
    %4 = vector.broadcast %3 : vector<1x16xf32> to vector<248x16xf32>
    %5 = arith.addf %2, %4 : vector<248x16xf32>
    %cst_5 = arith.constant 0.000000e+00 : f32
    %6 = vector.broadcast %cst_5 : f32 to vector<248x16xf32>
    %7 = arith.cmpf oge, %5, %6 : vector<248x16xf32>
    %cst_6 = arith.constant 0.00999999977 : f32
    %8 = vector.broadcast %cst_6 : f32 to vector<248x16xf32>
    %9 = arith.mulf %8, %5 : vector<248x16xf32>
    %10 = arith.select %7, %5, %9 : vector<248x16xi1>, vector<248x16xf32>
    %c0_7 = arith.constant 0 : index
    %c0_8 = arith.constant 0 : index
    %11 = vector.load %arg4[%c0_7, %c0_8] : memref<248x16xf32, #tpu.memory_space<vmem>>, vector<248x16xf32>
    tpu.vector_store %arg4[%c0_7, %c0_8], %10 {strides = array<i32>} : memref<248x16xf32, #tpu.memory_space<vmem>>, vector<248x16xf32>,
    return
  }
  func.func @transform_0(%arg0: i32) -> (i32, i32) {
    %c0_i32 = arith.constant 0 : i32
    %c0_i32_0 = arith.constant 0 : i32
    return %arg0, %c0_i32 : i32, i32
  }
  func.func @transform_1(%arg0: i32) -> (i32, i32) {
    %c0_i32 = arith.constant 0 : i32
    %c0_i32_0 = arith.constant 0 : i32
    %c0_i32_1 = arith.constant 0 : i32
    return %c0_i32, %c0_i32_0 : i32, i32
  }
  func.func @transform_2(%arg0: i32) -> (i32, i32) {
    %c0_i32 = arith.constant 0 : i32
    %c0_i32_0 = arith.constant 0 : i32
    %c0_i32_1 = arith.constant 0 : i32
    return %c0_i32, %c0_i32_0 : i32, i32
  }
  func.func @transform_3(%arg0: i32) -> (i32, i32) {
    %c0_i32 = arith.constant 0 : i32
    %c0_i32_0 = arith.constant 0 : i32
    return %arg0, %c0_i32 : i32, i32
  }
}

module attributes {stable_mosaic.version = 11 : i64} {
  func.func @_maxpool4_kernel(%arg0: i32, %arg1: memref<4x56x16xf32, #tpu.memory_space<vmem>>, %arg2: memref<56x16xf32, #tpu.memory_space<vmem>>) attributes {dimension_semantics = [#tpu.dimension_semantics<parallel>], iteration_bounds = array<i64: 1>, scalar_prefetch = 0 : i64, scratch_operands = 0 : i64, tpu.core_type = #tpu.core_type<tc>, window_params = [{transform_indices = @transform_0, window_bounds = array<i64: 4, 56, 16>}, {transform_indices = @transform_1, window_bounds = array<i64: 56, 16>}]} {
    %c0 = arith.constant 0 : index
    %c0_0 = arith.constant 0 : index
    %c0_1 = arith.constant 0 : index
    %0 = vector.load %arg1[%c0, %c0_0, %c0_1] : memref<4x56x16xf32, #tpu.memory_space<vmem>>, vector<1x56x16xf32>
    %1 = vector.shape_cast %0 : vector<1x56x16xf32> to vector<56x16xf32>
    %c1 = arith.constant 1 : index
    %c0_2 = arith.constant 0 : index
    %c0_3 = arith.constant 0 : index
    %2 = vector.load %arg1[%c1, %c0_2, %c0_3] : memref<4x56x16xf32, #tpu.memory_space<vmem>>, vector<1x56x16xf32>
    %3 = vector.shape_cast %2 : vector<1x56x16xf32> to vector<56x16xf32>
    %4 = arith.maximumf %1, %3 : vector<56x16xf32>
    %c2 = arith.constant 2 : index
    %c0_4 = arith.constant 0 : index
    %c0_5 = arith.constant 0 : index
    %5 = vector.load %arg1[%c2, %c0_4, %c0_5] : memref<4x56x16xf32, #tpu.memory_space<vmem>>, vector<1x56x16xf32>
    %6 = vector.shape_cast %5 : vector<1x56x16xf32> to vector<56x16xf32>
    %c3 = arith.constant 3 : index
    %c0_6 = arith.constant 0 : index
    %c0_7 = arith.constant 0 : index
    %7 = vector.load %arg1[%c3, %c0_6, %c0_7] : memref<4x56x16xf32, #tpu.memory_space<vmem>>, vector<1x56x16xf32>
    %8 = vector.shape_cast %7 : vector<1x56x16xf32> to vector<56x16xf32>
    %9 = arith.maximumf %6, %8 : vector<56x16xf32>
    %10 = arith.maximumf %4, %9 : vector<56x16xf32>
    %c0_8 = arith.constant 0 : index
    %c0_9 = arith.constant 0 : index
    %11 = vector.load %arg2[%c0_8, %c0_9] : memref<56x16xf32, #tpu.memory_space<vmem>>, vector<56x16xf32>
    tpu.vector_store %arg2[%c0_8, %c0_9], %10 {strides = array<i32>} : memref<56x16xf32, #tpu.memory_space<vmem>>, vector<56x16xf32>,
    return
  }
  func.func @transform_0(%arg0: i32) -> (i32, i32, i32) {
    %c0_i32 = arith.constant 0 : i32
    %c0_i32_0 = arith.constant 0 : i32
    %c0_i32_1 = arith.constant 0 : i32
    return %c0_i32, %arg0, %c0_i32_0 : i32, i32, i32
  }
  func.func @transform_1(%arg0: i32) -> (i32, i32) {
    %c0_i32 = arith.constant 0 : i32
    %c0_i32_0 = arith.constant 0 : i32
    return %arg0, %c0_i32 : i32, i32
  }
}

module attributes {stable_mosaic.version = 11 : i64} {
  func.func @_fc_head_kernel(%arg0: i32, %arg1: i32, %arg2: memref<8x512xf32, #tpu.memory_space<vmem>>, %arg3: memref<512x128xf32, #tpu.memory_space<vmem>>, %arg4: memref<1x128xf32, #tpu.memory_space<vmem>>, %arg5: memref<128x128xf32, #tpu.memory_space<vmem>>, %arg6: memref<1x128xf32, #tpu.memory_space<vmem>>, %arg7: memref<128x128xf32, #tpu.memory_space<vmem>>, %arg8: memref<1x128xf32, #tpu.memory_space<vmem>>, %arg9: memref<8x128xf32, #tpu.memory_space<vmem>>, %arg10: memref<8x128xf32, #tpu.memory_space<vmem>>) attributes {dimension_semantics = [#tpu.dimension_semantics<parallel>, #tpu.dimension_semantics<arbitrary>], iteration_bounds = array<i64: 1, 1>, scalar_prefetch = 0 : i64, scratch_operands = 1 : i64, tpu.core_type = #tpu.core_type<tc>, window_params = [{transform_indices = @transform_0, window_bounds = array<i64: 8, 512>}, {transform_indices = @transform_1, window_bounds = array<i64: 512, 128>}, {pipeline_mode = #tpu.pipeline_mode<synchronous>, transform_indices = @transform_2, window_bounds = array<i64: 1, 128>}, {pipeline_mode = #tpu.pipeline_mode<synchronous>, transform_indices = @transform_3, window_bounds = array<i64: 128, 128>}, {pipeline_mode = #tpu.pipeline_mode<synchronous>, transform_indices = @transform_4, window_bounds = array<i64: 1, 128>}, {pipeline_mode = #tpu.pipeline_mode<synchronous>, transform_indices = @transform_5, window_bounds = array<i64: 128, 128>}, {pipeline_mode = #tpu.pipeline_mode<synchronous>, transform_indices = @transform_6, window_bounds = array<i64: 1, 128>}, {transform_indices = @transform_7, window_bounds = array<i64: 8, 128>}]} {
    %c0_i32 = arith.constant 0 : i32
    %0 = arith.cmpi eq, %arg1, %c0_i32 : i32
    %1 = arith.extui %0 : i1 to i32
    %c0_i32_0 = arith.constant 0 : i32
    %2 = arith.cmpi ne, %1, %c0_i32_0 : i32
    scf.if %2 {
      %cst_10 = arith.constant 0.000000e+00 : f32
      %12 = vector.broadcast %cst_10 : f32 to vector<8x128xf32>
      %c0_11 = arith.constant 0 : index
      %c0_12 = arith.constant 0 : index
      %13 = vector.load %arg10[%c0_11, %c0_12] : memref<8x128xf32, #tpu.memory_space<vmem>>, vector<8x128xf32>
      tpu.vector_store %arg10[%c0_11, %c0_12], %12 {strides = array<i32>} : memref<8x128xf32, #tpu.memory_space<vmem>>, vector<8x128xf32>,
    } else {
    }
    %c0 = arith.constant 0 : index
    %c0_1 = arith.constant 0 : index
    %3 = vector.load %arg10[%c0, %c0_1] : memref<8x128xf32, #tpu.memory_space<vmem>>, vector<8x128xf32>
    %c0_2 = arith.constant 0 : index
    %c0_3 = arith.constant 0 : index
    %4 = vector.load %arg2[%c0_2, %c0_3] : memref<8x512xf32, #tpu.memory_space<vmem>>, vector<8x512xf32>
    %c0_4 = arith.constant 0 : index
    %c0_5 = arith.constant 0 : index
    %5 = vector.load %arg3[%c0_4, %c0_5] : memref<512x128xf32, #tpu.memory_space<vmem>>, vector<512x128xf32>
    %cst = arith.constant dense<0.000000e+00> : vector<8x128xf32>
    %6 = tpu.matmul %4, %5, %cst {dimension_numbers = #tpu.dot_dimension_numbers<[1], [0], [0], [1], [0, 0, 1, 1], [], []>} : vector<8x512xf32>, vector<512x128xf32>, vector<8x128xf32> -> vector<8x128xf32>
    %7 = arith.addf %3, %6 : vector<8x128xf32>
    %c0_6 = arith.constant 0 : index
    %c0_7 = arith.constant 0 : index
    %8 = vector.load %arg10[%c0_6, %c0_7] : memref<8x128xf32, #tpu.memory_space<vmem>>, vector<8x128xf32>
    tpu.vector_store %arg10[%c0_6, %c0_7], %7 {strides = array<i32>} : memref<8x128xf32, #tpu.memory_space<vmem>>, vector<8x128xf32>,
    %c0_i32_8 = arith.constant 0 : i32
    %9 = arith.cmpi eq, %arg1, %c0_i32_8 : i32
    %10 = arith.extui %9 : i1 to i32
    %c0_i32_9 = arith.constant 0 : i32
    %11 = arith.cmpi ne, %10, %c0_i32_9 : i32
    scf.if %11 {
      %c0_10 = arith.constant 0 : index
      %c0_11 = arith.constant 0 : index
      %12 = vector.load %arg10[%c0_10, %c0_11] : memref<8x128xf32, #tpu.memory_space<vmem>>, vector<8x128xf32>
      %c0_12 = arith.constant 0 : index
      %c0_13 = arith.constant 0 : index
      %13 = vector.load %arg4[%c0_12, %c0_13] : memref<1x128xf32, #tpu.memory_space<vmem>>, vector<1x128xf32>
      %14 = vector.broadcast %13 : vector<1x128xf32> to vector<8x128xf32>
      %15 = arith.addf %12, %14 : vector<8x128xf32>
      %cst_14 = arith.constant 0.000000e+00 : f32
      %16 = vector.broadcast %cst_14 : f32 to vector<8x128xf32>
      %17 = arith.cmpf oge, %15, %16 : vector<8x128xf32>
      %cst_15 = arith.constant 0.00999999977 : f32
      %18 = vector.broadcast %cst_15 : f32 to vector<8x128xf32>
      %19 = arith.mulf %18, %15 : vector<8x128xf32>
      %20 = arith.select %17, %15, %19 : vector<8x128xi1>, vector<8x128xf32>
      %c0_16 = arith.constant 0 : index
      %c0_17 = arith.constant 0 : index
      %21 = vector.load %arg5[%c0_16, %c0_17] : memref<128x128xf32, #tpu.memory_space<vmem>>, vector<128x128xf32>
      %cst_18 = arith.constant dense<0.000000e+00> : vector<8x128xf32>
      %22 = tpu.matmul %20, %21, %cst_18 {dimension_numbers = #tpu.dot_dimension_numbers<[1], [0], [0], [1], [0, 0, 1, 1], [], []>} : vector<8x128xf32>, vector<128x128xf32>, vector<8x128xf32> -> vector<8x128xf32>
      %c0_19 = arith.constant 0 : index
      %c0_20 = arith.constant 0 : index
      %23 = vector.load %arg6[%c0_19, %c0_20] : memref<1x128xf32, #tpu.memory_space<vmem>>, vector<1x128xf32>
      %24 = vector.broadcast %23 : vector<1x128xf32> to vector<8x128xf32>
      %25 = arith.addf %22, %24 : vector<8x128xf32>
      %cst_21 = arith.constant 0.000000e+00 : f32
      %26 = vector.broadcast %cst_21 : f32 to vector<8x128xf32>
      %27 = arith.cmpf oge, %25, %26 : vector<8x128xf32>
      %cst_22 = arith.constant 0.00999999977 : f32
      %28 = vector.broadcast %cst_22 : f32 to vector<8x128xf32>
      %29 = arith.mulf %28, %25 : vector<8x128xf32>
      %30 = arith.select %27, %25, %29 : vector<8x128xi1>, vector<8x128xf32>
      %c0_23 = arith.constant 0 : index
      %c0_24 = arith.constant 0 : index
      %31 = vector.load %arg7[%c0_23, %c0_24] : memref<128x128xf32, #tpu.memory_space<vmem>>, vector<128x128xf32>
      %cst_25 = arith.constant dense<0.000000e+00> : vector<8x128xf32>
      %32 = tpu.matmul %30, %31, %cst_25 {dimension_numbers = #tpu.dot_dimension_numbers<[1], [0], [0], [1], [0, 0, 1, 1], [], []>} : vector<8x128xf32>, vector<128x128xf32>, vector<8x128xf32> -> vector<8x128xf32>
      %c0_26 = arith.constant 0 : index
      %c0_27 = arith.constant 0 : index
      %33 = vector.load %arg8[%c0_26, %c0_27] : memref<1x128xf32, #tpu.memory_space<vmem>>, vector<1x128xf32>
      %34 = vector.broadcast %33 : vector<1x128xf32> to vector<8x128xf32>
      %35 = arith.addf %32, %34 : vector<8x128xf32>
      %36 = tpu.iota {dimensions = array<i32: 1>} : vector<8x128xi32>
      %c7_i32 = arith.constant 7 : i32
      %37 = vector.broadcast %c7_i32 : i32 to vector<8x128xi32>
      %38 = arith.cmpi slt, %36, %37 : vector<8x128xi32>
      %cst_28 = arith.constant -1.000000e+30 : f32
      %39 = vector.broadcast %cst_28 : f32 to vector<8x128xf32>
      %40 = arith.select %38, %35, %39 : vector<8x128xi1>, vector<8x128xf32>
      %cst_29 = arith.constant dense<0xFF800000> : vector<8xf32>
      %41 = vector.multi_reduction <maximumf>, %40, %cst_29 [1] : vector<8x128xf32> to vector<8xf32>
      %42 = vector.shape_cast %41 : vector<8xf32> to vector<8x1xf32>
      %43 = vector.broadcast %42 : vector<8x1xf32> to vector<8x128xf32>
      %44 = arith.subf %40, %43 : vector<8x128xf32>
      %45 = math.exp %44 : vector<8x128xf32>
      %cst_30 = arith.constant dense<0.000000e+00> : vector<8xf32>
      %46 = vector.multi_reduction <add>, %45, %cst_30 [1] : vector<8x128xf32> to vector<8xf32>
      %47 = vector.shape_cast %46 : vector<8xf32> to vector<8x1xf32>
      %48 = math.log %47 : vector<8x1xf32>
      %49 = arith.addf %48, %42 : vector<8x1xf32>
      %50 = vector.broadcast %49 : vector<8x1xf32> to vector<8x128xf32>
      %51 = arith.subf %40, %50 : vector<8x128xf32>
      %c0_31 = arith.constant 0 : index
      %c0_32 = arith.constant 0 : index
      %52 = vector.load %arg9[%c0_31, %c0_32] : memref<8x128xf32, #tpu.memory_space<vmem>>, vector<8x128xf32>
      tpu.vector_store %arg9[%c0_31, %c0_32], %51 {strides = array<i32>} : memref<8x128xf32, #tpu.memory_space<vmem>>, vector<8x128xf32>,
    } else {
    }
    return
  }
  func.func @transform_0(%arg0: i32, %arg1: i32) -> (i32, i32) {
    %c0_i32 = arith.constant 0 : i32
    return %arg0, %arg1 : i32, i32
  }
  func.func @transform_1(%arg0: i32, %arg1: i32) -> (i32, i32) {
    %c0_i32 = arith.constant 0 : i32
    %c0_i32_0 = arith.constant 0 : i32
    return %arg1, %c0_i32 : i32, i32
  }
  func.func @transform_2(%arg0: i32, %arg1: i32) -> (i32, i32) {
    %c0_i32 = arith.constant 0 : i32
    %c0_i32_0 = arith.constant 0 : i32
    %c0_i32_1 = arith.constant 0 : i32
    return %c0_i32, %c0_i32_0 : i32, i32
  }
  func.func @transform_3(%arg0: i32, %arg1: i32) -> (i32, i32) {
    %c0_i32 = arith.constant 0 : i32
    %c0_i32_0 = arith.constant 0 : i32
    %c0_i32_1 = arith.constant 0 : i32
    return %c0_i32, %c0_i32_0 : i32, i32
  }
  func.func @transform_4(%arg0: i32, %arg1: i32) -> (i32, i32) {
    %c0_i32 = arith.constant 0 : i32
    %c0_i32_0 = arith.constant 0 : i32
    %c0_i32_1 = arith.constant 0 : i32
    return %c0_i32, %c0_i32_0 : i32, i32
  }
  func.func @transform_5(%arg0: i32, %arg1: i32) -> (i32, i32) {
    %c0_i32 = arith.constant 0 : i32
    %c0_i32_0 = arith.constant 0 : i32
    %c0_i32_1 = arith.constant 0 : i32
    return %c0_i32, %c0_i32_0 : i32, i32
  }
  func.func @transform_6(%arg0: i32, %arg1: i32) -> (i32, i32) {
    %c0_i32 = arith.constant 0 : i32
    %c0_i32_0 = arith.constant 0 : i32
    %c0_i32_1 = arith.constant 0 : i32
    return %c0_i32, %c0_i32_0 : i32, i32
  }
  func.func @transform_7(%arg0: i32, %arg1: i32) -> (i32, i32) {
    %c0_i32 = arith.constant 0 : i32
    %c0_i32_0 = arith.constant 0 : i32
    return %arg0, %c0_i32 : i32, i32
  }
}

</mosaic_0001>

<llo_original>
// kernel: forward.6
$region0: #{forward.6}
  #allocation0 [shape = 'u32[]', space=smem, size = 0x4, offset = 0x4, fixed_abs, tag = 'smem constant byte address 0x4 - core index']
  #allocation1 [shape = 'u32[144,128]{1,0:T(1,128)}', space=vmem, size = 0x12000, scoped, tag = 'internal scratch']
  %s0 = inlined_call_operand.vmem [shape: f32[4,168,12], index: 0, kind: input, shape index: {}]
  %s1 = inlined_call_operand.vmem [shape: f32[168,12], index: 1, kind: output, shape index: {}]
  %s2 = sld [smem:[#allocation0]]
  $region14: #{forward.6} parent=0
    _
  %s4 = ssub.s32 1, %s2
  %s5 = scalar_select 0, %s4, %s2
  // Predicated region
  $region2: #{forward.6} parent=0 // pred_check
    _
  $region3: #{forward.6} parent=0 // pred_check_branch
    %7 = sbr.rel (0) target = $region5
  $region4: #{forward.6} parent=0 // pred_region
    _
  $region5: #{forward.6} parent=0 // pred_fallthru
    _
  %v8 = vld [vmem:[%s0] sm:$0xff]
  %v9 = vld [vmem:[%s0 + $0x8] sm:$0xff]
  %v10 = vld [vmem:[%s0 + $0x10] sm:$0xff]
  %v11 = vld [vmem:[%s0 + $0x18] sm:$0xff]
  %v12 = vld [vmem:[%s0 + $0x20] sm:$0xff]
  %v13 = vld [vmem:[%s0 + $0x28] sm:$0xff]
  %v14 = vld [vmem:[%s0 + $0x30] sm:$0xff]
  %v15 = vld [vmem:[%s0 + $0x38] sm:$0xff]
  %v16 = vld [vmem:[%s0 + $0x40] sm:$0xff]
  %v17 = vld [vmem:[%s0 + $0x48] sm:$0xff]
  %v18 = vld [vmem:[%s0 + $0x50] sm:$0xff]
  %v19 = vld [vmem:[%s0 + $0x58] sm:$0xff]
  %v20 = vld [vmem:[%s0 + $0x60] sm:$0xff]
  %v21 = vld [vmem:[%s0 + $0x68] sm:$0xff]
  %v22 = vld [vmem:[%s0 + $0x70] sm:$0xff]
  %v23 = vld [vmem:[%s0 + $0x78] sm:$0xff]
  %v24 = vld [vmem:[%s0 + $0x80] sm:$0xff]
  %v25 = vld [vmem:[%s0 + $0x88] sm:$0xff]
  %v26 = vld [vmem:[%s0 + $0x90] sm:$0xff]
  %v27 = vld [vmem:[%s0 + $0x98] sm:$0xff]
  %v28 = vld [vmem:[%s0 + $0xa0] sm:$0xff]
  %s29 = scalar_lea.vmem %s0, 168
  %v30 = vld [vmem:[%s29] sm:$0xff]
  %v31 = vld [vmem:[%s29 + $0x8] sm:$0xff]
  %v32 = vld [vmem:[%s29 + $0x10] sm:$0xff]
  %v33 = vld [vmem:[%s29 + $0x18] sm:$0xff]
  %v34 = vld [vmem:[%s29 + $0x20] sm:$0xff]
  %v35 = vld [vmem:[%s29 + $0x28] sm:$0xff]
  %v36 = vld [vmem:[%s29 + $0x30] sm:$0xff]
  %v37 = vld [vmem:[%s29 + $0x38] sm:$0xff]
  %v38 = vld [vmem:[%s29 + $0x40] sm:$0xff]
  %v39 = vld [vmem:[%s29 + $0x48] sm:$0xff]
  %v40 = vld [vmem:[%s29 + $0x50] sm:$0xff]
  %v41 = vld [vmem:[%s29 + $0x58] sm:$0xff]
  %v42 = vld [vmem:[%s29 + $0x60] sm:$0xff]
  %v43 = vld [vmem:[%s29 + $0x68] sm:$0xff]
  %v44 = vld [vmem:[%s29 + $0x70] sm:$0xff]
  %v45 = vld [vmem:[%s29 + $0x78] sm:$0xff]
  %v46 = vld [vmem:[%s29 + $0x80] sm:$0xff]
  %v47 = vld [vmem:[%s29 + $0x88] sm:$0xff]
  %v48 = vld [vmem:[%s29 + $0x90] sm:$0xff]
  %v49 = vld [vmem:[%s29 + $0x98] sm:$0xff]
  %v50 = vld [vmem:[%s29 + $0xa0] sm:$0xff]
  %v51 = vmax.f32 %v8, %v30
  %v52 = vmax.f32 %v9, %v31
  %v53 = vmax.f32 %v10, %v32
  %v54 = vmax.f32 %v11, %v33
  %v55 = vmax.f32 %v12, %v34
  %v56 = vmax.f32 %v13, %v35
  %v57 = vmax.f32 %v14, %v36
  %v58 = vmax.f32 %v15, %v37
  %v59 = vmax.f32 %v16, %v38
  %v60 = vmax.f32 %v17, %v39
  %v61 = vmax.f32 %v18, %v40
  %v62 = vmax.f32 %v19, %v41
  %v63 = vmax.f32 %v20, %v42
  %v64 = vmax.f32 %v21, %v43
  %v65 = vmax.f32 %v22, %v44
  %v66 = vmax.f32 %v23, %v45
  %v67 = vmax.f32 %v24, %v46
  %v68 = vmax.f32 %v25, %v47
  %v69 = vmax.f32 %v26, %v48
  %v70 = vmax.f32 %v27, %v49
  %v71 = vmax.f32 %v28, %v50
  %s72 = scalar_lea.vmem %s0, 336
  %v73 = vld [vmem:[%s72] sm:$0xff]
  %v74 = vld [vmem:[%s72 + $0x8] sm:$0xff]
  %v75 = vld [vmem:[%s72 + $0x10] sm:$0xff]
  %v76 = vld [vmem:[%s72 + $0x18] sm:$0xff]
  %v77 = vld [vmem:[%s72 + $0x20] sm:$0xff]
  %v78 = vld [vmem:[%s72 + $0x28] sm:$0xff]
  %v79 = vld [vmem:[%s72 + $0x30] sm:$0xff]
  %v80 = vld [vmem:[%s72 + $0x38] sm:$0xff]
  %v81 = vld [vmem:[%s72 + $0x40] sm:$0xff]
  %v82 = vld [vmem:[%s72 + $0x48] sm:$0xff]
  %v83 = vld [vmem:[%s72 + $0x50] sm:$0xff]
  %v84 = vld [vmem:[%s72 + $0x58] sm:$0xff]
  %v85 = vld [vmem:[%s72 + $0x60] sm:$0xff]
  %v86 = vld [vmem:[%s72 + $0x68] sm:$0xff]
  %v87 = vld [vmem:[%s72 + $0x70] sm:$0xff]
  %v88 = vld [vmem:[%s72 + $0x78] sm:$0xff]
  %v89 = vld [vmem:[%s72 + $0x80] sm:$0xff]
  %v90 = vld [vmem:[%s72 + $0x88] sm:$0xff]
  %v91 = vld [vmem:[%s72 + $0x90] sm:$0xff]
  %v92 = vld [vmem:[%s72 + $0x98] sm:$0xff]
  %v93 = vld [vmem:[%s72 + $0xa0] sm:$0xff]
  %s94 = scalar_lea.vmem %s0, 504
  %v95 = vld [vmem:[%s94] sm:$0xff]
  %v96 = vld [vmem:[%s94 + $0x8] sm:$0xff]
  %v97 = vld [vmem:[%s94 + $0x10] sm:$0xff]
  %v98 = vld [vmem:[%s94 + $0x18] sm:$0xff]
  %v99 = vld [vmem:[%s94 + $0x20] sm:$0xff]
  %v100 = vld [vmem:[%s94 + $0x28] sm:$0xff]
  %v101 = vld [vmem:[%s94 + $0x30] sm:$0xff]
  %v102 = vld [vmem:[%s94 + $0x38] sm:$0xff]
  %v103 = vld [vmem:[%s94 + $0x40] sm:$0xff]
  %v104 = vld [vmem:[%s94 + $0x48] sm:$0xff]
  %v105 = vld [vmem:[%s94 + $0x50] sm:$0xff]
  %v106 = vld [vmem:[%s94 + $0x58] sm:$0xff]
  %v107 = vld [vmem:[%s94 + $0x60] sm:$0xff]
  %v108 = vld [vmem:[%s94 + $0x68] sm:$0xff]
  %v109 = vld [vmem:[%s94 + $0x70] sm:$0xff]
  %v110 = vld [vmem:[%s94 + $0x78] sm:$0xff]
  %v111 = vld [vmem:[%s94 + $0x80] sm:$0xff]
  %v112 = vld [vmem:[%s94 + $0x88] sm:$0xff]
  %v113 = vld [vmem:[%s94 + $0x90] sm:$0xff]
  %v114 = vld [vmem:[%s94 + $0x98] sm:$0xff]
  %v115 = vld [vmem:[%s94 + $0xa0] sm:$0xff]
  %v116 = vmax.f32 %v73, %v95
  %v117 = vmax.f32 %v74, %v96
  %v118 = vmax.f32 %v75, %v97
  %v119 = vmax.f32 %v76, %v98
  %v120 = vmax.f32 %v77, %v99
  %v121 = vmax.f32 %v78, %v100
  %v122 = vmax.f32 %v79, %v101
  %v123 = vmax.f32 %v80, %v102
  %v124 = vmax.f32 %v81, %v103
  %v125 = vmax.f32 %v82, %v104
  %v126 = vmax.f32 %v83, %v105
  %v127 = vmax.f32 %v84, %v106
  %v128 = vmax.f32 %v85, %v107
  %v129 = vmax.f32 %v86, %v108
  %v130 = vmax.f32 %v87, %v109
  %v131 = vmax.f32 %v88, %v110
  %v132 = vmax.f32 %v89, %v111
  %v133 = vmax.f32 %v90, %v112
  %v134 = vmax.f32 %v91, %v113
  %v135 = vmax.f32 %v92, %v114
  %v136 = vmax.f32 %v93, %v115
  %v137 = vmax.f32 %v51, %v116
  %v138 = vmax.f32 %v52, %v117
  %v139 = vmax.f32 %v53, %v118
  %v140 = vmax.f32 %v54, %v119
  %v141 = vmax.f32 %v55, %v120
  %v142 = vmax.f32 %v56, %v121
  %v143 = vmax.f32 %v57, %v122
  %v144 = vmax.f32 %v58, %v123
  %v145 = vmax.f32 %v59, %v124
  %v146 = vmax.f32 %v60, %v125
  %v147 = vmax.f32 %v61, %v126
  %v148 = vmax.f32 %v62, %v127
  %v149 = vmax.f32 %v63, %v128
  %v150 = vmax.f32 %v64, %v129
  %v151 = vmax.f32 %v65, %v130
  %v152 = vmax.f32 %v66, %v131
  %v153 = vmax.f32 %v67, %v132
  %v154 = vmax.f32 %v68, %v133
  %v155 = vmax.f32 %v69, %v134
  %v156 = vmax.f32 %v70, %v135
  %v157 = vmax.f32 %v71, %v136
  %vm158 = vcmask 97280
  %159 = vst.msk [vmem:[%s1] sm:$0xff] %vm158, %v137
  %160 = vst.msk [vmem:[%s1 + $0x8] sm:$0xff] %vm158, %v138
  %161 = vst.msk [vmem:[%s1 + $0x10] sm:$0xff] %vm158, %v139
  %162 = vst.msk [vmem:[%s1 + $0x18] sm:$0xff] %vm158, %v140
  %163 = vst.msk [vmem:[%s1 + $0x20] sm:$0xff] %vm158, %v141
  %164 = vst.msk [vmem:[%s1 + $0x28] sm:$0xff] %vm158, %v142
  %165 = vst.msk [vmem:[%s1 + $0x30] sm:$0xff] %vm158, %v143
  %166 = vst.msk [vmem:[%s1 + $0x38] sm:$0xff] %vm158, %v144
  %167 = vst.msk [vmem:[%s1 + $0x40] sm:$0xff] %vm158, %v145
  %168 = vst.msk [vmem:[%s1 + $0x48] sm:$0xff] %vm158, %v146
  %169 = vst.msk [vmem:[%s1 + $0x50] sm:$0xff] %vm158, %v147
  %170 = vst.msk [vmem:[%s1 + $0x58] sm:$0xff] %vm158, %v148
  %171 = vst.msk [vmem:[%s1 + $0x60] sm:$0xff] %vm158, %v149
  %172 = vst.msk [vmem:[%s1 + $0x68] sm:$0xff] %vm158, %v150
  %173 = vst.msk [vmem:[%s1 + $0x70] sm:$0xff] %vm158, %v151
  %174 = vst.msk [vmem:[%s1 + $0x78] sm:$0xff] %vm158, %v152
  %175 = vst.msk [vmem:[%s1 + $0x80] sm:$0xff] %vm158, %v153
  %176 = vst.msk [vmem:[%s1 + $0x88] sm:$0xff] %vm158, %v154
  %177 = vst.msk [vmem:[%s1 + $0x90] sm:$0xff] %vm158, %v155
  %178 = vst.msk [vmem:[%s1 + $0x98] sm:$0xff] %vm158, %v156
  %179 = vst.msk [vmem:[%s1 + $0xa0] sm:$0xff] %vm158, %v157
  // Predicated region
  $region6: #{forward.6} parent=0 // pred_check
    _
  $region7: #{forward.6} parent=0 // pred_check_branch
    %181 = sbr.rel (0) target = $region9
  $region8: #{forward.6} parent=0 // pred_region
    _
  $region9: #{forward.6} parent=0 // pred_fallthru
    _
  // Predicated region
  $region10: #{forward.6} parent=0 // pred_check
    _
  $region11: #{forward.6} parent=0 // pred_check_branch
    %183 = sbr.rel (0) target = $region13
  $region12: #{forward.6} parent=0 // pred_region
    _
  $region13: #{forward.6} parent=0 // pred_fallthru
    _

// kernel: forward.5
$region0: #{forward.5}
  #allocation0 [shape = 'u32[]', space=smem, size = 0x4, offset = 0x4, fixed_abs, tag = 'smem constant byte address 0x4 - core index']
  #allocation1 [shape = 'u32[144,128]{1,0:T(1,128)}', space=vmem, size = 0x12000, scoped, tag = 'internal scratch']
  %s0 = inlined_call_operand.vmem [shape: f32[648,9], index: 0, kind: input, shape index: {}]
  %s1 = inlined_call_operand.hbm [shape: f32[9,12], index: 1, kind: input, shape index: {}]
  %s2 = inlined_call_operand.hbm [shape: f32[1,12], index: 2, kind: input, shape index: {}]
  %s3 = inlined_call_operand.vmem [shape: f32[648,12], index: 3, kind: output, shape index: {}]
  %s4 = sld [smem:[#allocation0]]
  $region30: #{forward.5} parent=0
    _
  %s6 = ssub.s32 1, %s4
  %s7 = scalar_select 0, %s6, %s4
  $region1: #{forward.5} parent=0
    #allocation2 [shape = 'u8[8192]{0}', space=vmem, size = 0x2000, scoped, tag = 'input window, operand 1, single buffered']
    #allocation3 [shape = 's32[1]{0}', space=sflag, size = 0x4, scoped, tag = 'scoped memory for forward.5']
    #allocation4 [shape = 'u8[512]{0}', space=vmem, size = 0x400, scoped, tag = 'input window, operand 2, single buffered']
    #allocation5 [shape = 's32[1]{0}', space=sflag, size = 0x4, scoped, tag = 'scoped memory for forward.5']
    %8 = vsyncpa [#allocation3], 0
    %9 = vsyncpa [#allocation5], 0
    // Predicated region
    $region2: #{forward.5} parent=1 // pred_check
      _
    $region3: #{forward.5} parent=1 // pred_check_branch
      %11 = sbr.rel (0) target = $region5
    $region4: #{forward.5} parent=1 // pred_region
      _
    $region5: #{forward.5} parent=1 // pred_fallthru
      _
    // Predicated region
    $region6: #{forward.5} parent=1 // pred_check
      _
    $region7: #{forward.5} parent=1 // pred_check_branch
      %13 = sbr.rel (0) target = $region9
    $region8: #{forward.5} parent=1 // pred_region
      %s15 = ssub.s32 256, 256
      %16 = vsyncadd [#allocation3], %s15
      %s17 = sshll.u32 [#allocation2], 4
      %s18 = int_to_ptr.vmem [resolvable:$true] %s17
      %23 = dma.hbm_to_vmem [thread:$0]  %s1, 256, %s18, [#allocation3], 128, 128, 8
    $region9: #{forward.5} parent=1 // pred_fallthru
      _
    // Predicated region
    $region10: #{forward.5} parent=1 // pred_check
      _
    $region11: #{forward.5} parent=1 // pred_check_branch
      %25 = sbr.rel (0) target = $region13
    $region12: #{forward.5} parent=1 // pred_region
      %s27 = ssub.s32 16, 16
      %28 = vsyncadd [#allocation5], %s27
      %s30 = sshll.u32 [#allocation4], 4
      %s31 = int_to_ptr.vmem [resolvable:$true] %s30
      %33 = dma.hbm_to_vmem [thread:$0]  %s2, 16, %s31, [#allocation5]
    $region13: #{forward.5} parent=1 // pred_fallthru
      _
    // Predicated region
    $region14: #{forward.5} parent=1 // pred_check
      _
    $region15: #{forward.5} parent=1 // pred_check_branch
      %35 = sbr.rel (0) target = $region17
    $region16: #{forward.5} parent=1 // pred_region
      %36 = dma.done [#allocation3], 256
    $region17: #{forward.5} parent=1 // pred_fallthru
      _
    // Predicated region
    $region18: #{forward.5} parent=1 // pred_check
      _
    $region19: #{forward.5} parent=1 // pred_check_branch
      %38 = sbr.rel (0) target = $region21
    $region20: #{forward.5} parent=1 // pred_region
      %39 = dma.done [#allocation5], 16
    $region21: #{forward.5} parent=1 // pred_fallthru
      _
    %v40 = vld [vmem:[%s0] sm:$0xff]
    %v41 = vld [vmem:[%s0 + $0x8] sm:$0xff]
    %v42 = vld [vmem:[%s0 + $0x10] sm:$0xff]
    %v43 = vld [vmem:[%s0 + $0x18] sm:$0xff]
    %v44 = vld [vmem:[%s0 + $0x20] sm:$0xff]
    %v45 = vld [vmem:[%s0 + $0x28] sm:$0xff]
    %v46 = vld [vmem:[%s0 + $0x30] sm:$0xff]
    %v47 = vld [vmem:[%s0 + $0x38] sm:$0xff]
    %v48 = vld [vmem:[%s0 + $0x40] sm:$0xff]
    %v49 = vld [vmem:[%s0 + $0x48] sm:$0xff]
    %v50 = vld [vmem:[%s0 + $0x50] sm:$0xff]
    %v51 = vld [vmem:[%s0 + $0x58] sm:$0xff]
    %v52 = vld [vmem:[%s0 + $0x60] sm:$0xff]
    %v53 = vld [vmem:[%s0 + $0x68] sm:$0xff]
    %v54 = vld [vmem:[%s0 + $0x70] sm:$0xff]
    %v55 = vld [vmem:[%s0 + $0x78] sm:$0xff]
    %v56 = vld [vmem:[%s0 + $0x80] sm:$0xff]
    %v57 = vld [vmem:[%s0 + $0x88] sm:$0xff]
    %v58 = vld [vmem:[%s0 + $0x90] sm:$0xff]
    %v59 = vld [vmem:[%s0 + $0x98] sm:$0xff]
    %v60 = vld [vmem:[%s0 + $0xa0] sm:$0xff]
    %v61 = vld [vmem:[%s0 + $0xa8] sm:$0xff]
    %v62 = vld [vmem:[%s0 + $0xb0] sm:$0xff]
    %v63 = vld [vmem:[%s0 + $0xb8] sm:$0xff]
    %v64 = vld [vmem:[%s0 + $0xc0] sm:$0xff]
    %v65 = vld [vmem:[%s0 + $0xc8] sm:$0xff]
    %v66 = vld [vmem:[%s0 + $0xd0] sm:$0xff]
    %v67 = vld [vmem:[%s0 + $0xd8] sm:$0xff]
    %v68 = vld [vmem:[%s0 + $0xe0] sm:$0xff]
    %v69 = vld [vmem:[%s0 + $0xe8] sm:$0xff]
    %v70 = vld [vmem:[%s0 + $0xf0] sm:$0xff]
    %v71 = vld [vmem:[%s0 + $0xf8] sm:$0xff]
    %v72 = vld [vmem:[%s0 + $0x100] sm:$0xff]
    %v73 = vld [vmem:[%s0 + $0x108] sm:$0xff]
    %v74 = vld [vmem:[%s0 + $0x110] sm:$0xff]
    %v75 = vld [vmem:[%s0 + $0x118] sm:$0xff]
    %v76 = vld [vmem:[%s0 + $0x120] sm:$0xff]
    %v77 = vld [vmem:[%s0 + $0x128] sm:$0xff]
    %v78 = vld [vmem:[%s0 + $0x130] sm:$0xff]
    %v79 = vld [vmem:[%s0 + $0x138] sm:$0xff]
    %v80 = vld [vmem:[%s0 + $0x140] sm:$0xff]
    %v81 = vld [vmem:[%s0 + $0x148] sm:$0xff]
    %v82 = vld [vmem:[%s0 + $0x150] sm:$0xff]
    %v83 = vld [vmem:[%s0 + $0x158] sm:$0xff]
    %v84 = vld [vmem:[%s0 + $0x160] sm:$0xff]
    %v85 = vld [vmem:[%s0 + $0x168] sm:$0xff]
    %v86 = vld [vmem:[%s0 + $0x170] sm:$0xff]
    %v87 = vld [vmem:[%s0 + $0x178] sm:$0xff]
    %v88 = vld [vmem:[%s0 + $0x180] sm:$0xff]
    %v89 = vld [vmem:[%s0 + $0x188] sm:$0xff]
    %v90 = vld [vmem:[%s0 + $0x190] sm:$0xff]
    %v91 = vld [vmem:[%s0 + $0x198] sm:$0xff]
    %v92 = vld [vmem:[%s0 + $0x1a0] sm:$0xff]
    %v93 = vld [vmem:[%s0 + $0x1a8] sm:$0xff]
    %v94 = vld [vmem:[%s0 + $0x1b0] sm:$0xff]
    %v95 = vld [vmem:[%s0 + $0x1b8] sm:$0xff]
    %v96 = vld [vmem:[%s0 + $0x1c0] sm:$0xff]
    %v97 = vld [vmem:[%s0 + $0x1c8] sm:$0xff]
    %v98 = vld [vmem:[%s0 + $0x1d0] sm:$0xff]
    %v99 = vld [vmem:[%s0 + $0x1d8] sm:$0xff]
    %v100 = vld [vmem:[%s0 + $0x1e0] sm:$0xff]
    %v101 = vld [vmem:[%s0 + $0x1e8] sm:$0xff]
    %v102 = vld [vmem:[%s0 + $0x1f0] sm:$0xff]
    %v103 = vld [vmem:[%s0 + $0x1f8] sm:$0xff]
    %v104 = vld [vmem:[%s0 + $0x200] sm:$0xff]
    %v105 = vld [vmem:[%s0 + $0x208] sm:$0xff]
    %v106 = vld [vmem:[%s0 + $0x210] sm:$0xff]
    %v107 = vld [vmem:[%s0 + $0x218] sm:$0xff]
    %v108 = vld [vmem:[%s0 + $0x220] sm:$0xff]
    %v109 = vld [vmem:[%s0 + $0x228] sm:$0xff]
    %v110 = vld [vmem:[%s0 + $0x230] sm:$0xff]
    %v111 = vld [vmem:[%s0 + $0x238] sm:$0xff]
    %v112 = vld [vmem:[%s0 + $0x240] sm:$0xff]
    %v113 = vld [vmem:[%s0 + $0x248] sm:$0xff]
    %v114 = vld [vmem:[%s0 + $0x250] sm:$0xff]
    %v115 = vld [vmem:[%s0 + $0x258] sm:$0xff]
    %v116 = vld [vmem:[%s0 + $0x260] sm:$0xff]
    %v117 = vld [vmem:[%s0 + $0x268] sm:$0xff]
    %v118 = vld [vmem:[%s0 + $0x270] sm:$0xff]
    %v119 = vld [vmem:[%s0 + $0x278] sm:$0xff]
    %v120 = vld [vmem:[%s0 + $0x280] sm:$0xff]
    %v121 = vld [vmem:[#allocation2] sm:$0xff]
    %v122 = vld [vmem:[#allocation2 + $0x8] sm:$0x1]
    %v123 = vld [vmem:[#allocation4] sm:$0x1]
    %v125 = vlaneseq
    %v126 = vshrl.u32 %v125, 7
    %v127 = vsub.s32 0, %v126
    %v128 = vrot.slane %v123, %v127
    %vm130 = vcmask 72704
    %v132 = vsel %vm130, %v40, 0
    %v135 = vsel %vm130, %v41, 0
    %v138 = vsel %vm130, %v42, 0
    %v141 = vsel %vm130, %v43, 0
    %v144 = vsel %vm130, %v44, 0
    %v147 = vsel %vm130, %v45, 0
    %v150 = vsel %vm130, %v46, 0
    %v153 = vsel %vm130, %v47, 0
    %v156 = vsel %vm130, %v48, 0
    %v159 = vsel %vm130, %v49, 0
    %v162 = vsel %vm130, %v50, 0
    %v165 = vsel %vm130, %v51, 0
    %v168 = vsel %vm130, %v52, 0
    %v171 = vsel %vm130, %v53, 0
    %v174 = vsel %vm130, %v54, 0
    %v177 = vsel %vm130, %v55, 0
    %v180 = vsel %vm130, %v56, 0
    %v183 = vsel %vm130, %v57, 0
    %v186 = vsel %vm130, %v58, 0
    %v189 = vsel %vm130, %v59, 0
    %v192 = vsel %vm130, %v60, 0
    %v195 = vsel %vm130, %v61, 0
    %v198 = vsel %vm130, %v62, 0
    %v201 = vsel %vm130, %v63, 0
    %v204 = vsel %vm130, %v64, 0
    %v207 = vsel %vm130, %v65, 0
    %v210 = vsel %vm130, %v66, 0
    %v213 = vsel %vm130, %v67, 0
    %v216 = vsel %vm130, %v68, 0
    %v219 = vsel %vm130, %v69, 0
    %v222 = vsel %vm130, %v70, 0
    %v225 = vsel %vm130, %v71, 0
    %v228 = vsel %vm130, %v72, 0
    %v231 = vsel %vm130, %v73, 0
    %v234 = vsel %vm130, %v74, 0
    %v237 = vsel %vm130, %v75, 0
    %v240 = vsel %vm130, %v76, 0
    %v243 = vsel %vm130, %v77, 0
    %v246 = vsel %vm130, %v78, 0
    %v249 = vsel %vm130, %v79, 0
    %v252 = vsel %vm130, %v80, 0
    %v255 = vsel %vm130, %v81, 0
    %v258 = vsel %vm130, %v82, 0
    %v261 = vsel %vm130, %v83, 0
    %v264 = vsel %vm130, %v84, 0
    %v267 = vsel %vm130, %v85, 0
    %v270 = vsel %vm130, %v86, 0
    %v273 = vsel %vm130, %v87, 0
    %v276 = vsel %vm130, %v88, 0
    %v279 = vsel %vm130, %v89, 0
    %v282 = vsel %vm130, %v90, 0
    %v285 = vsel %vm130, %v91, 0
    %v288 = vsel %vm130, %v92, 0
    %v291 = vsel %vm130, %v93, 0
    %v294 = vsel %vm130, %v94, 0
    %v297 = vsel %vm130, %v95, 0
    %v300 = vsel %vm130, %v96, 0
    %v303 = vsel %vm130, %v97, 0
    %v306 = vsel %vm130, %v98, 0
    %v309 = vsel %vm130, %v99, 0
    %v312 = vsel %vm130, %v100, 0
    %v315 = vsel %vm130, %v101, 0
    %v318 = vsel %vm130, %v102, 0
    %v321 = vsel %vm130, %v103, 0
    %v324 = vsel %vm130, %v104, 0
    %v327 = vsel %vm130, %v105, 0
    %v330 = vsel %vm130, %v106, 0
    %v333 = vsel %vm130, %v107, 0
    %v336 = vsel %vm130, %v108, 0
    %v339 = vsel %vm130, %v109, 0
    %v342 = vsel %vm130, %v110, 0
    %v345 = vsel %vm130, %v111, 0
    %v348 = vsel %vm130, %v112, 0
    %v351 = vsel %vm130, %v113, 0
    %v354 = vsel %vm130, %v114, 0
    %v357 = vsel %vm130, %v115, 0
    %v360 = vsel %vm130, %v116, 0
    %v363 = vsel %vm130, %v117, 0
    %v366 = vsel %vm130, %v118, 0
    %v369 = vsel %vm130, %v119, 0
    %v372 = vsel %vm130, %v120, 0
    %vm374 = vcmask 1040384
    %v376 = vsel %vm374, %v122, 0
    %378 = vmatprep.subr.mxu0 0.0
    %379 = vmatpush1.msra.mxu0 %v121
    %380 = vmatprep.subr.mxu0 0.0
    %381 = vmatpush1.msra.mxu0 %v376
    %382 = vmatprep.subr.mxu0 0.0
    %383 = vmatpush1.msra.mxu0 0.0
    %384 = vmatprep.subr.mxu0 0.0
    %385 = vmatpush1.msra.mxu0 0.0
    %386 = vmatprep.subr.mxu0 0.0
    %387 = vmatpush1.msra.mxu0 0.0
    %388 = vmatprep.subr.mxu0 0.0
    %389 = vmatpush1.msra.mxu0 0.0
    %390 = vmatprep.subr.mxu0 0.0
    %391 = vmatpush1.msra.mxu0 0.0
    %392 = vmatprep.subr.mxu0 0.0
    %393 = vmatpush1.msra.mxu0 0.0
    %394 = vmatprep.subr.mxu0 0.0
    %395 = vmatpush1.msra.mxu0 0.0
    %396 = vmatprep.subr.mxu0 0.0
    %397 = vmatpush1.msra.mxu0 0.0
    %398 = vmatprep.subr.mxu0 0.0
    %399 = vmatpush1.msra.mxu0 0.0
    %400 = vmatprep.subr.mxu0 0.0
    %401 = vmatpush1.msra.mxu0 0.0
    %402 = vmatprep.subr.mxu0 0.0
    %403 = vmatpush1.msra.mxu0 0.0
    %404 = vmatprep.subr.mxu0 0.0
    %405 = vmatpush1.msra.mxu0 0.0
    %406 = vmatprep.subr.mxu0 0.0
    %407 = vmatpush1.msra.mxu0 0.0
    %408 = vmatprep.subr.mxu0 0.0
    %409 = vmatpush1.msra.mxu0 0.0
    %410 = vmatprep.subr.mxu0 0.0
    %411 = vmatpush1.msra.mxu0 0.0
    %412 = vmatprep.subr.mxu0 0.0
    %413 = vmatpush1.msra.mxu0 0.0
    %414 = vmatprep.subr.mxu0 0.0
    %415 = vmatpush1.msra.mxu0 0.0
    %416 = vmatprep.subr.mxu0 0.0
    %417 = vmatpush1.msra.mxu0 0.0
    %418 = vmatprep.subr.mxu0 0.0
    %419 = vmatpush1.msra.mxu0 0.0
    %420 = vmatprep.subr.mxu0 0.0
    %421 = vmatpush1.msra.mxu0 0.0
    %422 = vmatprep.subr.mxu0 0.0
    %423 = vmatpush1.msra.mxu0 0.0
    %424 = vmatprep.subr.mxu0 0.0
    %425 = vmatpush1.msra.mxu0 0.0
    %426 = vmatprep.subr.mxu0 0.0
    %427 = vmatpush1.msra.mxu0 0.0
    %428 = vmatprep.subr.mxu0 0.0
    %429 = vmatpush1.msra.mxu0 0.0
    %430 = vmatprep.subr.mxu0 0.0
    %431 = vmatpush1.msra.mxu0 0.0
    %432 = vmatprep.subr.mxu0 0.0
    %433 = vmatpush1.msra.mxu0 0.0
    %434 = vmatprep.subr.mxu0 0.0
    %435 = vmatpush1.msra.mxu0 0.0
    %436 = vmatprep.subr.mxu0 0.0
    %437 = vmatpush1.msra.mxu0 0.0
    %438 = vmatprep.subr.mxu0 0.0
    %439 = vmatpush1.msra.mxu0 0.0
    %440 = vmatprep.subr.mxu0 0.0
    %441 = vmatpush1.msra.mxu0 0.0
    %442 = vmatprep.mubr.f32.mxu0 0.0
    %443 = vmatmul.mubr.f32.gmra.mrb[0].mxu0 %v132
    %v444 = vpop.f32.mrb[0].mxu0
    %v445 = vadd.f32 %v128, %v444
    %v446 = vpop.f32.mrb[0].mxu0
    %447 = vmatprep.mubr.f32.mxu0 0.0
    %448 = vmatmul.mubr.f32.gmra.mrb[0].mxu0 %v135
    %v449 = vpop.f32.mrb[0].mxu0
    %v450 = vadd.f32 %v128, %v449
    %v451 = vpop.f32.mrb[0].mxu0
    %452 = vmatprep.mubr.f32.mxu0 0.0
    %453 = vmatmul.mubr.f32.gmra.mrb[0].mxu0 %v138
    %v454 = vpop.f32.mrb[0].mxu0
    %v455 = vadd.f32 %v128, %v454
    %v456 = vpop.f32.mrb[0].mxu0
    %457 = vmatprep.mubr.f32.mxu0 0.0
    %458 = vmatmul.mubr.f32.gmra.mrb[0].mxu0 %v141
    %v459 = vpop.f32.mrb[0].mxu0
    %v460 = vadd.f32 %v128, %v459
    %v461 = vpop.f32.mrb[0].mxu0
    %462 = vmatprep.mubr.f32.mxu0 0.0
    %463 = vmatmul.mubr.f32.gmra.mrb[0].mxu0 %v144
    %v464 = vpop.f32.mrb[0].mxu0
    %v465 = vadd.f32 %v128, %v464
    %v466 = vpop.f32.mrb[0].mxu0
    %467 = vmatprep.mubr.f32.mxu0 0.0
    %468 = vmatmul.mubr.f32.gmra.mrb[0].mxu0 %v147
    %v469 = vpop.f32.mrb[0].mxu0
    %v470 = vadd.f32 %v128, %v469
    %v471 = vpop.f32.mrb[0].mxu0
    %472 = vmatprep.mubr.f32.mxu0 0.0
    %473 = vmatmul.mubr.f32.gmra.mrb[0].mxu0 %v150
    %v474 = vpop.f32.mrb[0].mxu0
    %v475 = vadd.f32 %v128, %v474
    %v476 = vpop.f32.mrb[0].mxu0
    %477 = vmatprep.mubr.f32.mxu0 0.0
    %478 = vmatmul.mubr.f32.gmra.mrb[0].mxu0 %v153
    %v479 = vpop.f32.mrb[0].mxu0
    %v480 = vadd.f32 %v128, %v479
    %v481 = vpop.f32.mrb[0].mxu0
    %482 = vmatprep.mubr.f32.mxu0 0.0
    %483 = vmatmul.mubr.f32.gmra.mrb[0].mxu0 %v156
    %v484 = vpop.f32.mrb[0].mxu0
    %v485 = vadd.f32 %v128, %v484
    %v486 = vpop.f32.mrb[0].mxu0
    %487 = vmatprep.mubr.f32.mxu0 0.0
    %488 = vmatmul.mubr.f32.gmra.mrb[0].mxu0 %v159
    %v489 = vpop.f32.mrb[0].mxu0
    %v490 = vadd.f32 %v128, %v489
    %v491 = vpop.f32.mrb[0].mxu0
    %492 = vmatprep.mubr.f32.mxu0 0.0
    %493 = vmatmul.mubr.f32.gmra.mrb[0].mxu0 %v162
    %v494 = vpop.f32.mrb[0].mxu0
    %v495 = vadd.f32 %v128, %v494
    %v496 = vpop.f32.mrb[0].mxu0
    %497 = vmatprep.mubr.f32.mxu0 0.0
    %498 = vmatmul.mubr.f32.gmra.mrb[0].mxu0 %v165
    %v499 = vpop.f32.mrb[0].mxu0
    %v500 = vadd.f32 %v128, %v499
    %v501 = vpop.f32.mrb[0].mxu0
    %502 = vmatprep.mubr.f32.mxu0 0.0
    %503 = vmatmul.mubr.f32.gmra.mrb[0].mxu0 %v168
    %v504 = vpop.f32.mrb[0].mxu0
    %v505 = vadd.f32 %v128, %v504
    %v506 = vpop.f32.mrb[0].mxu0
    %507 = vmatprep.mubr.f32.mxu0 0.0
    %508 = vmatmul.mubr.f32.gmra.mrb[0].mxu0 %v171
    %v509 = vpop.f32.mrb[0].mxu0
    %v510 = vadd.f32 %v128, %v509
    %v511 = vpop.f32.mrb[0].mxu0
    %512 = vmatprep.mubr.f32.mxu0 0.0
    %513 = vmatmul.mubr.f32.gmra.mrb[0].mxu0 %v174
    %v514 = vpop.f32.mrb[0].mxu0
    %v515 = vadd.f32 %v128, %v514
    %v516 = vpop.f32.mrb[0].mxu0
    %517 = vmatprep.mubr.f32.mxu0 0.0
    %518 = vmatmul.mubr.f32.gmra.mrb[0].mxu0 %v177
    %v519 = vpop.f32.mrb[0].mxu0
    %v520 = vadd.f32 %v128, %v519
    %v521 = vpop.f32.mrb[0].mxu0
    %522 = vmatprep.mubr.f32.mxu0 0.0
    %523 = vmatmul.mubr.f32.gmra.mrb[0].mxu0 %v180
    %v524 = vpop.f32.mrb[0].mxu0
    %v525 = vadd.f32 %v128, %v524
    %v526 = vpop.f32.mrb[0].mxu0
    %527 = vmatprep.mubr.f32.mxu0 0.0
    %528 = vmatmul.mubr.f32.gmra.mrb[0].mxu0 %v183
    %v529 = vpop.f32.mrb[0].mxu0
    %v530 = vadd.f32 %v128, %v529
    %v531 = vpop.f32.mrb[0].mxu0
    %532 = vmatprep.mubr.f32.mxu0 0.0
    %533 = vmatmul.mubr.f32.gmra.mrb[0].mxu0 %v186
    %v534 = vpop.f32.mrb[0].mxu0
    %v535 = vadd.f32 %v128, %v534
    %v536 = vpop.f32.mrb[0].mxu0
    %537 = vmatprep.mubr.f32.mxu0 0.0
    %538 = vmatmul.mubr.f32.gmra.mrb[0].mxu0 %v189
    %v539 = vpop.f32.mrb[0].mxu0
    %v540 = vadd.f32 %v128, %v539
    %v541 = vpop.f32.mrb[0].mxu0
    %542 = vmatprep.mubr.f32.mxu0 0.0
    %543 = vmatmul.mubr.f32.gmra.mrb[0].mxu0 %v192
    %v544 = vpop.f32.mrb[0].mxu0
    %v545 = vadd.f32 %v128, %v544
    %v546 = vpop.f32.mrb[0].mxu0
    %547 = vmatprep.mubr.f32.mxu0 0.0
    %548 = vmatmul.mubr.f32.gmra.mrb[0].mxu0 %v195
    %v549 = vpop.f32.mrb[0].mxu0
    %v550 = vadd.f32 %v128, %v549
    %v551 = vpop.f32.mrb[0].mxu0
    %552 = vmatprep.mubr.f32.mxu0 0.0
    %553 = vmatmul.mubr.f32.gmra.mrb[0].mxu0 %v198
    %v554 = vpop.f32.mrb[0].mxu0
    %v555 = vadd.f32 %v128, %v554
    %v556 = vpop.f32.mrb[0].mxu0
    %557 = vmatprep.mubr.f32.mxu0 0.0
    %558 = vmatmul.mubr.f32.gmra.mrb[0].mxu0 %v201
    %v559 = vpop.f32.mrb[0].mxu0
    %v560 = vadd.f32 %v128, %v559
    %v561 = vpop.f32.mrb[0].mxu0
    %562 = vmatprep.mubr.f32.mxu0 0.0
    %563 = vmatmul.mubr.f32.gmra.mrb[0].mxu0 %v204
    %v564 = vpop.f32.mrb[0].mxu0
    %v565 = vadd.f32 %v128, %v564
    %v566 = vpop.f32.mrb[0].mxu0
    %567 = vmatprep.mubr.f32.mxu0 0.0
    %568 = vmatmul.mubr.f32.gmra.mrb[0].mxu0 %v207
    %v569 = vpop.f32.mrb[0].mxu0
    %v570 = vadd.f32 %v128, %v569
    %v571 = vpop.f32.mrb[0].mxu0
    %572 = vmatprep.mubr.f32.mxu0 0.0
    %573 = vmatmul.mubr.f32.gmra.mrb[0].mxu0 %v210
    %v574 = vpop.f32.mrb[0].mxu0
    %v575 = vadd.f32 %v128, %v574
    %v576 = vpop.f32.mrb[0].mxu0
    %577 = vmatprep.mubr.f32.mxu0 0.0
    %578 = vmatmul.mubr.f32.gmra.mrb[0].mxu0 %v213
    %v579 = vpop.f32.mrb[0].mxu0
    %v580 = vadd.f32 %v128, %v579
    %v581 = vpop.f32.mrb[0].mxu0
    %582 = vmatprep.mubr.f32.mxu0 0.0
    %583 = vmatmul.mubr.f32.gmra.mrb[0].mxu0 %v216
    %v584 = vpop.f32.mrb[0].mxu0
    %v585 = vadd.f32 %v128, %v584
    %v586 = vpop.f32.mrb[0].mxu0
    %587 = vmatprep.mubr.f32.mxu0 0.0
    %588 = vmatmul.mubr.f32.gmra.mrb[0].mxu0 %v219
    %v589 = vpop.f32.mrb[0].mxu0
    %v590 = vadd.f32 %v128, %v589
    %v591 = vpop.f32.mrb[0].mxu0
    %592 = vmatprep.mubr.f32.mxu0 0.0
    %593 = vmatmul.mubr.f32.gmra.mrb[0].mxu0 %v222
    %v594 = vpop.f32.mrb[0].mxu0
    %v595 = vadd.f32 %v128, %v594
    %v596 = vpop.f32.mrb[0].mxu0
    %597 = vmatprep.mubr.f32.mxu0 0.0
    %598 = vmatmul.mubr.f32.gmra.mrb[0].mxu0 %v225
    %v599 = vpop.f32.mrb[0].mxu0
    %v600 = vadd.f32 %v128, %v599
    %v601 = vpop.f32.mrb[0].mxu0
    %602 = vmatprep.mubr.f32.mxu0 0.0
    %603 = vmatmul.mubr.f32.gmra.mrb[0].mxu0 %v228
    %v604 = vpop.f32.mrb[0].mxu0
    %v605 = vadd.f32 %v128, %v604
    %v606 = vpop.f32.mrb[0].mxu0
    %607 = vmatprep.mubr.f32.mxu0 0.0
    %608 = vmatmul.mubr.f32.gmra.mrb[0].mxu0 %v231
    %v609 = vpop.f32.mrb[0].mxu0
    %v610 = vadd.f32 %v128, %v609
    %v611 = vpop.f32.mrb[0].mxu0
    %612 = vmatprep.mubr.f32.mxu0 0.0
    %613 = vmatmul.mubr.f32.gmra.mrb[0].mxu0 %v234
    %v614 = vpop.f32.mrb[0].mxu0
    %v615 = vadd.f32 %v128, %v614
    %v616 = vpop.f32.mrb[0].mxu0
    %617 = vmatprep.mubr.f32.mxu0 0.0
    %618 = vmatmul.mubr.f32.gmra.mrb[0].mxu0 %v237
    %v619 = vpop.f32.mrb[0].mxu0
    %v620 = vadd.f32 %v128, %v619
    %v621 = vpop.f32.mrb[0].mxu0
    %622 = vmatprep.mubr.f32.mxu0 0.0
    %623 = vmatmul.mubr.f32.gmra.mrb[0].mxu0 %v240
    %v624 = vpop.f32.mrb[0].mxu0
    %v625 = vadd.f32 %v128, %v624
    %v626 = vpop.f32.mrb[0].mxu0
    %627 = vmatprep.mubr.f32.mxu0 0.0
    %628 = vmatmul.mubr.f32.gmra.mrb[0].mxu0 %v243
    %v629 = vpop.f32.mrb[0].mxu0
    %v630 = vadd.f32 %v128, %v629
    %v631 = vpop.f32.mrb[0].mxu0
    %632 = vmatprep.mubr.f32.mxu0 0.0
    %633 = vmatmul.mubr.f32.gmra.mrb[0].mxu0 %v246
    %v634 = vpop.f32.mrb[0].mxu0
    %v635 = vadd.f32 %v128, %v634
    %v636 = vpop.f32.mrb[0].mxu0
    %637 = vmatprep.mubr.f32.mxu0 0.0
    %638 = vmatmul.mubr.f32.gmra.mrb[0].mxu0 %v249
    %v639 = vpop.f32.mrb[0].mxu0
    %v640 = vadd.f32 %v128, %v639
    %v641 = vpop.f32.mrb[0].mxu0
    %642 = vmatprep.mubr.f32.mxu0 0.0
    %643 = vmatmul.mubr.f32.gmra.mrb[0].mxu0 %v252
    %v644 = vpop.f32.mrb[0].mxu0
    %v645 = vadd.f32 %v128, %v644
    %v646 = vpop.f32.mrb[0].mxu0
    %647 = vmatprep.mubr.f32.mxu0 0.0
    %648 = vmatmul.mubr.f32.gmra.mrb[0].mxu0 %v255
    %v649 = vpop.f32.mrb[0].mxu0
    %v650 = vadd.f32 %v128, %v649
    %v651 = vpop.f32.mrb[0].mxu0
    %652 = vmatprep.mubr.f32.mxu0 0.0
    %653 = vmatmul.mubr.f32.gmra.mrb[0].mxu0 %v258
    %v654 = vpop.f32.mrb[0].mxu0
    %v655 = vadd.f32 %v128, %v654
    %v656 = vpop.f32.mrb[0].mxu0
    %657 = vmatprep.mubr.f32.mxu0 0.0
    %658 = vmatmul.mubr.f32.gmra.mrb[0].mxu0 %v261
    %v659 = vpop.f32.mrb[0].mxu0
    %v660 = vadd.f32 %v128, %v659
    %v661 = vpop.f32.mrb[0].mxu0
    %662 = vmatprep.mubr.f32.mxu0 0.0
    %663 = vmatmul.mubr.f32.gmra.mrb[0].mxu0 %v264
    %v664 = vpop.f32.mrb[0].mxu0
    %v665 = vadd.f32 %v128, %v664
    %v666 = vpop.f32.mrb[0].mxu0
    %667 = vmatprep.mubr.f32.mxu0 0.0
    %668 = vmatmul.mubr.f32.gmra.mrb[0].mxu0 %v267
    %v669 = vpop.f32.mrb[0].mxu0
    %v670 = vadd.f32 %v128, %v669
    %v671 = vpop.f32.mrb[0].mxu0
    %672 = vmatprep.mubr.f32.mxu0 0.0
    %673 = vmatmul.mubr.f32.gmra.mrb[0].mxu0 %v270
    %v674 = vpop.f32.mrb[0].mxu0
    %v675 = vadd.f32 %v128, %v674
    %v676 = vpop.f32.mrb[0].mxu0
    %677 = vmatprep.mubr.f32.mxu0 0.0
    %678 = vmatmul.mubr.f32.gmra.mrb[0].mxu0 %v273
    %v679 = vpop.f32.mrb[0].mxu0
    %v680 = vadd.f32 %v128, %v679
    %v681 = vpop.f32.mrb[0].mxu0
    %682 = vmatprep.mubr.f32.mxu0 0.0
    %683 = vmatmul.mubr.f32.gmra.mrb[0].mxu0 %v276
    %v684 = vpop.f32.mrb[0].mxu0
    %v685 = vadd.f32 %v128, %v684
    %v686 = vpop.f32.mrb[0].mxu0
    %687 = vmatprep.mubr.f32.mxu0 0.0
    %688 = vmatmul.mubr.f32.gmra.mrb[0].mxu0 %v279
    %v689 = vpop.f32.mrb[0].mxu0
    %v690 = vadd.f32 %v128, %v689
    %v691 = vpop.f32.mrb[0].mxu0
    %692 = vmatprep.mubr.f32.mxu0 0.0
    %693 = vmatmul.mubr.f32.gmra.mrb[0].mxu0 %v282
    %v694 = vpop.f32.mrb[0].mxu0
    %v695 = vadd.f32 %v128, %v694
    %v696 = vpop.f32.mrb[0].mxu0
    %697 = vmatprep.mubr.f32.mxu0 0.0
    %698 = vmatmul.mubr.f32.gmra.mrb[0].mxu0 %v285
    %v699 = vpop.f32.mrb[0].mxu0
    %v700 = vadd.f32 %v128, %v699
    %v701 = vpop.f32.mrb[0].mxu0
    %702 = vmatprep.mubr.f32.mxu0 0.0
    %703 = vmatmul.mubr.f32.gmra.mrb[0].mxu0 %v288
    %v704 = vpop.f32.mrb[0].mxu0
    %v705 = vadd.f32 %v128, %v704
    %v706 = vpop.f32.mrb[0].mxu0
    %707 = vmatprep.mubr.f32.mxu0 0.0
    %708 = vmatmul.mubr.f32.gmra.mrb[0].mxu0 %v291
    %v709 = vpop.f32.mrb[0].mxu0
    %v710 = vadd.f32 %v128, %v709
    %v711 = vpop.f32.mrb[0].mxu0
    %712 = vmatprep.mubr.f32.mxu0 0.0
    %713 = vmatmul.mubr.f32.gmra.mrb[0].mxu0 %v294
    %v714 = vpop.f32.mrb[0].mxu0
    %v715 = vadd.f32 %v128, %v714
    %v716 = vpop.f32.mrb[0].mxu0
    %717 = vmatprep.mubr.f32.mxu0 0.0
    %718 = vmatmul.mubr.f32.gmra.mrb[0].mxu0 %v297
    %v719 = vpop.f32.mrb[0].mxu0
    %v720 = vadd.f32 %v128, %v719
    %v721 = vpop.f32.mrb[0].mxu0
    %722 = vmatprep.mubr.f32.mxu0 0.0
    %723 = vmatmul.mubr.f32.gmra.mrb[0].mxu0 %v300
    %v724 = vpop.f32.mrb[0].mxu0
    %v725 = vadd.f32 %v128, %v724
    %v726 = vpop.f32.mrb[0].mxu0
    %727 = vmatprep.mubr.f32.mxu0 0.0
    %728 = vmatmul.mubr.f32.gmra.mrb[0].mxu0 %v303
    %v729 = vpop.f32.mrb[0].mxu0
    %v730 = vadd.f32 %v128, %v729
    %v731 = vpop.f32.mrb[0].mxu0
    %732 = vmatprep.mubr.f32.mxu0 0.0
    %733 = vmatmul.mubr.f32.gmra.mrb[0].mxu0 %v306
    %v734 = vpop.f32.mrb[0].mxu0
    %v735 = vadd.f32 %v128, %v734
    %v736 = vpop.f32.mrb[0].mxu0
    %737 = vmatprep.mubr.f32.mxu0 0.0
    %738 = vmatmul.mubr.f32.gmra.mrb[0].mxu0 %v309
    %v739 = vpop.f32.mrb[0].mxu0
    %v740 = vadd.f32 %v128, %v739
    %v741 = vpop.f32.mrb[0].mxu0
    %742 = vmatprep.mubr.f32.mxu0 0.0
    %743 = vmatmul.mubr.f32.gmra.mrb[0].mxu0 %v312
    %v744 = vpop.f32.mrb[0].mxu0
    %v745 = vadd.f32 %v128, %v744
    %v746 = vpop.f32.mrb[0].mxu0
    %747 = vmatprep.mubr.f32.mxu0 0.0
    %748 = vmatmul.mubr.f32.gmra.mrb[0].mxu0 %v315
    %v749 = vpop.f32.mrb[0].mxu0
    %v750 = vadd.f32 %v128, %v749
    %v751 = vpop.f32.mrb[0].mxu0
    %752 = vmatprep.mubr.f32.mxu0 0.0
    %753 = vmatmul.mubr.f32.gmra.mrb[0].mxu0 %v318
    %v754 = vpop.f32.mrb[0].mxu0
    %v755 = vadd.f32 %v128, %v754
    %v756 = vpop.f32.mrb[0].mxu0
    %757 = vmatprep.mubr.f32.mxu0 0.0
    %758 = vmatmul.mubr.f32.gmra.mrb[0].mxu0 %v321
    %v759 = vpop.f32.mrb[0].mxu0
    %v760 = vadd.f32 %v128, %v759
    %v761 = vpop.f32.mrb[0].mxu0
    %762 = vmatprep.mubr.f32.mxu0 0.0
    %763 = vmatmul.mubr.f32.gmra.mrb[0].mxu0 %v324
    %v764 = vpop.f32.mrb[0].mxu0
    %v765 = vadd.f32 %v128, %v764
    %v766 = vpop.f32.mrb[0].mxu0
    %767 = vmatprep.mubr.f32.mxu0 0.0
    %768 = vmatmul.mubr.f32.gmra.mrb[0].mxu0 %v327
    %v769 = vpop.f32.mrb[0].mxu0
    %v770 = vadd.f32 %v128, %v769
    %v771 = vpop.f32.mrb[0].mxu0
    %772 = vmatprep.mubr.f32.mxu0 0.0
    %773 = vmatmul.mubr.f32.gmra.mrb[0].mxu0 %v330
    %v774 = vpop.f32.mrb[0].mxu0
    %v775 = vadd.f32 %v128, %v774
    %v776 = vpop.f32.mrb[0].mxu0
    %777 = vmatprep.mubr.f32.mxu0 0.0
    %778 = vmatmul.mubr.f32.gmra.mrb[0].mxu0 %v333
    %v779 = vpop.f32.mrb[0].mxu0
    %v780 = vadd.f32 %v128, %v779
    %v781 = vpop.f32.mrb[0].mxu0
    %782 = vmatprep.mubr.f32.mxu0 0.0
    %783 = vmatmul.mubr.f32.gmra.mrb[0].mxu0 %v336
    %v784 = vpop.f32.mrb[0].mxu0
    %v785 = vadd.f32 %v128, %v784
    %v786 = vpop.f32.mrb[0].mxu0
    %787 = vmatprep.mubr.f32.mxu0 0.0
    %788 = vmatmul.mubr.f32.gmra.mrb[0].mxu0 %v339
    %v789 = vpop.f32.mrb[0].mxu0
    %v790 = vadd.f32 %v128, %v789
    %v791 = vpop.f32.mrb[0].mxu0
    %792 = vmatprep.mubr.f32.mxu0 0.0
    %793 = vmatmul.mubr.f32.gmra.mrb[0].mxu0 %v342
    %v794 = vpop.f32.mrb[0].mxu0
    %v795 = vadd.f32 %v128, %v794
    %v796 = vpop.f32.mrb[0].mxu0
    %797 = vmatprep.mubr.f32.mxu0 0.0
    %798 = vmatmul.mubr.f32.gmra.mrb[0].mxu0 %v345
    %v799 = vpop.f32.mrb[0].mxu0
    %v800 = vadd.f32 %v128, %v799
    %v801 = vpop.f32.mrb[0].mxu0
    %802 = vmatprep.mubr.f32.mxu0 0.0
    %803 = vmatmul.mubr.f32.gmra.mrb[0].mxu0 %v348
    %v804 = vpop.f32.mrb[0].mxu0
    %v805 = vadd.f32 %v128, %v804
    %v806 = vpop.f32.mrb[0].mxu0
    %807 = vmatprep.mubr.f32.mxu0 0.0
    %808 = vmatmul.mubr.f32.gmra.mrb[0].mxu0 %v351
    %v809 = vpop.f32.mrb[0].mxu0
    %v810 = vadd.f32 %v128, %v809
    %v811 = vpop.f32.mrb[0].mxu0
    %812 = vmatprep.mubr.f32.mxu0 0.0
    %813 = vmatmul.mubr.f32.gmra.mrb[0].mxu0 %v354
    %v814 = vpop.f32.mrb[0].mxu0
    %v815 = vadd.f32 %v128, %v814
    %v816 = vpop.f32.mrb[0].mxu0
    %817 = vmatprep.mubr.f32.mxu0 0.0
    %818 = vmatmul.mubr.f32.gmra.mrb[0].mxu0 %v357
    %v819 = vpop.f32.mrb[0].mxu0
    %v820 = vadd.f32 %v128, %v819
    %v821 = vpop.f32.mrb[0].mxu0
    %822 = vmatprep.mubr.f32.mxu0 0.0
    %823 = vmatmul.mubr.f32.gmra.mrb[0].mxu0 %v360
    %v824 = vpop.f32.mrb[0].mxu0
    %v825 = vadd.f32 %v128, %v824
    %v826 = vpop.f32.mrb[0].mxu0
    %827 = vmatprep.mubr.f32.mxu0 0.0
    %828 = vmatmul.mubr.f32.gmra.mrb[0].mxu0 %v363
    %v829 = vpop.f32.mrb[0].mxu0
    %v830 = vadd.f32 %v128, %v829
    %v831 = vpop.f32.mrb[0].mxu0
    %832 = vmatprep.mubr.f32.mxu0 0.0
    %833 = vmatmul.mubr.f32.gmra.mrb[0].mxu0 %v366
    %v834 = vpop.f32.mrb[0].mxu0
    %v835 = vadd.f32 %v128, %v834
    %v836 = vpop.f32.mrb[0].mxu0
    %837 = vmatprep.mubr.f32.mxu0 0.0
    %838 = vmatmul.mubr.f32.gmra.mrb[0].mxu0 %v369
    %v839 = vpop.f32.mrb[0].mxu0
    %v840 = vadd.f32 %v128, %v839
    %v841 = vpop.f32.mrb[0].mxu0
    %842 = vmatprep.mubr.f32.mxu0 0.0
    %843 = vmatmul.mubr.f32.gmra.mrb[0].mxu0 %v372
    %v844 = vpop.f32.mrb[0].mxu0
    %v845 = vadd.f32 %v128, %v844
    %v846 = vpop.f32.mrb[0].mxu0
    %847 = vdwg.mxu0
    %vm848 = vcmp.ge.f32.partialorder %v445, 0.0
    %vm849 = vcmp.ge.f32.partialorder %v450, 0.0
    %vm850 = vcmp.ge.f32.partialorder %v455, 0.0
    %vm851 = vcmp.ge.f32.partialorder %v460, 0.0
    %vm852 = vcmp.ge.f32.partialorder %v465, 0.0
    %vm853 = vcmp.ge.f32.partialorder %v470, 0.0
    %vm854 = vcmp.ge.f32.partialorder %v475, 0.0
    %vm855 = vcmp.ge.f32.partialorder %v480, 0.0
    %vm856 = vcmp.ge.f32.partialorder %v485, 0.0
    %vm857 = vcmp.ge.f32.partialorder %v490, 0.0
    %vm858 = vcmp.ge.f32.partialorder %v495, 0.0
    %vm859 = vcmp.ge.f32.partialorder %v500, 0.0
    %vm860 = vcmp.ge.f32.partialorder %v505, 0.0
    %vm861 = vcmp.ge.f32.partialorder %v510, 0.0
    %vm862 = vcmp.ge.f32.partialorder %v515, 0.0
    %vm863 = vcmp.ge.f32.partialorder %v520, 0.0
    %vm864 = vcmp.ge.f32.partialorder %v525, 0.0
    %vm865 = vcmp.ge.f32.partialorder %v530, 0.0
    %vm866 = vcmp.ge.f32.partialorder %v535, 0.0
    %vm867 = vcmp.ge.f32.partialorder %v540, 0.0
    %vm868 = vcmp.ge.f32.partialorder %v545, 0.0
    %vm869 = vcmp.ge.f32.partialorder %v550, 0.0
    %vm870 = vcmp.ge.f32.partialorder %v555, 0.0
    %vm871 = vcmp.ge.f32.partialorder %v560, 0.0
    %vm872 = vcmp.ge.f32.partialorder %v565, 0.0
    %vm873 = vcmp.ge.f32.partialorder %v570, 0.0
    %vm874 = vcmp.ge.f32.partialorder %v575, 0.0
    %vm875 = vcmp.ge.f32.partialorder %v580, 0.0
    %vm876 = vcmp.ge.f32.partialorder %v585, 0.0
    %vm877 = vcmp.ge.f32.partialorder %v590, 0.0
    %vm878 = vcmp.ge.f32.partialorder %v595, 0.0
    %vm879 = vcmp.ge.f32.partialorder %v600, 0.0
    %vm880 = vcmp.ge.f32.partialorder %v605, 0.0
    %vm881 = vcmp.ge.f32.partialorder %v610, 0.0
    %vm882 = vcmp.ge.f32.partialorder %v615, 0.0
    %vm883 = vcmp.ge.f32.partialorder %v620, 0.0
    %vm884 = vcmp.ge.f32.partialorder %v625, 0.0
    %vm885 = vcmp.ge.f32.partialorder %v630, 0.0
    %vm886 = vcmp.ge.f32.partialorder %v635, 0.0
    %vm887 = vcmp.ge.f32.partialorder %v640, 0.0
    %vm888 = vcmp.ge.f32.partialorder %v645, 0.0
    %vm889 = vcmp.ge.f32.partialorder %v650, 0.0
    %vm890 = vcmp.ge.f32.partialorder %v655, 0.0
    %vm891 = vcmp.ge.f32.partialorder %v660, 0.0
    %vm892 = vcmp.ge.f32.partialorder %v665, 0.0
    %vm893 = vcmp.ge.f32.partialorder %v670, 0.0
    %vm894 = vcmp.ge.f32.partialorder %v675, 0.0
    %vm895 = vcmp.ge.f32.partialorder %v680, 0.0
    %vm896 = vcmp.ge.f32.partialorder %v685, 0.0
    %vm897 = vcmp.ge.f32.partialorder %v690, 0.0
    %vm898 = vcmp.ge.f32.partialorder %v695, 0.0
    %vm899 = vcmp.ge.f32.partialorder %v700, 0.0
    %vm900 = vcmp.ge.f32.partialorder %v705, 0.0
    %vm901 = vcmp.ge.f32.partialorder %v710, 0.0
    %vm902 = vcmp.ge.f32.partialorder %v715, 0.0
    %vm903 = vcmp.ge.f32.partialorder %v720, 0.0
    %vm904 = vcmp.ge.f32.partialorder %v725, 0.0
    %vm905 = vcmp.ge.f32.partialorder %v730, 0.0
    %vm906 = vcmp.ge.f32.partialorder %v735, 0.0
    %vm907 = vcmp.ge.f32.partialorder %v740, 0.0
    %vm908 = vcmp.ge.f32.partialorder %v745, 0.0
    %vm909 = vcmp.ge.f32.partialorder %v750, 0.0
    %vm910 = vcmp.ge.f32.partialorder %v755, 0.0
    %vm911 = vcmp.ge.f32.partialorder %v760, 0.0
    %vm912 = vcmp.ge.f32.partialorder %v765, 0.0
    %vm913 = vcmp.ge.f32.partialorder %v770, 0.0
    %vm914 = vcmp.ge.f32.partialorder %v775, 0.0
    %vm915 = vcmp.ge.f32.partialorder %v780, 0.0
    %vm916 = vcmp.ge.f32.partialorder %v785, 0.0
    %vm917 = vcmp.ge.f32.partialorder %v790, 0.0
    %vm918 = vcmp.ge.f32.partialorder %v795, 0.0
    %vm919 = vcmp.ge.f32.partialorder %v800, 0.0
    %vm920 = vcmp.ge.f32.partialorder %v805, 0.0
    %vm921 = vcmp.ge.f32.partialorder %v810, 0.0
    %vm922 = vcmp.ge.f32.partialorder %v815, 0.0
    %vm923 = vcmp.ge.f32.partialorder %v820, 0.0
    %vm924 = vcmp.ge.f32.partialorder %v825, 0.0
    %vm925 = vcmp.ge.f32.partialorder %v830, 0.0
    %vm926 = vcmp.ge.f32.partialorder %v835, 0.0
    %vm927 = vcmp.ge.f32.partialorder %v840, 0.0
    %vm928 = vcmp.ge.f32.partialorder %v845, 0.0
    %v929 = vmul.f32 %v445, 0.01
    %v930 = vmul.f32 %v450, 0.01
    %v931 = vmul.f32 %v455, 0.01
    %v932 = vmul.f32 %v460, 0.01
    %v933 = vmul.f32 %v465, 0.01
    %v934 = vmul.f32 %v470, 0.01
    %v935 = vmul.f32 %v475, 0.01
    %v936 = vmul.f32 %v480, 0.01
    %v937 = vmul.f32 %v485, 0.01
    %v938 = vmul.f32 %v490, 0.01
    %v939 = vmul.f32 %v495, 0.01
    %v940 = vmul.f32 %v500, 0.01
    %v941 = vmul.f32 %v505, 0.01
    %v942 = vmul.f32 %v510, 0.01
    %v943 = vmul.f32 %v515, 0.01
    %v944 = vmul.f32 %v520, 0.01
    %v945 = vmul.f32 %v525, 0.01
    %v946 = vmul.f32 %v530, 0.01
    %v947 = vmul.f32 %v535, 0.01
    %v948 = vmul.f32 %v540, 0.01
    %v949 = vmul.f32 %v545, 0.01
    %v950 = vmul.f32 %v550, 0.01
    %v951 = vmul.f32 %v555, 0.01
    %v952 = vmul.f32 %v560, 0.01
    %v953 = vmul.f32 %v565, 0.01
    %v954 = vmul.f32 %v570, 0.01
    %v955 = vmul.f32 %v575, 0.01
    %v956 = vmul.f32 %v580, 0.01
    %v957 = vmul.f32 %v585, 0.01
    %v958 = vmul.f32 %v590, 0.01
    %v959 = vmul.f32 %v595, 0.01
    %v960 = vmul.f32 %v600, 0.01
    %v961 = vmul.f32 %v605, 0.01
    %v962 = vmul.f32 %v610, 0.01
    %v963 = vmul.f32 %v615, 0.01
    %v964 = vmul.f32 %v620, 0.01
    %v965 = vmul.f32 %v625, 0.01
    %v966 = vmul.f32 %v630, 0.01
    %v967 = vmul.f32 %v635, 0.01
    %v968 = vmul.f32 %v640, 0.01
    %v969 = vmul.f32 %v645, 0.01
    %v970 = vmul.f32 %v650, 0.01
    %v971 = vmul.f32 %v655, 0.01
    %v972 = vmul.f32 %v660, 0.01
    %v973 = vmul.f32 %v665, 0.01
    %v974 = vmul.f32 %v670, 0.01
    %v975 = vmul.f32 %v675, 0.01
    %v976 = vmul.f32 %v680, 0.01
    %v977 = vmul.f32 %v685, 0.01
    %v978 = vmul.f32 %v690, 0.01
    %v979 = vmul.f32 %v695, 0.01
    %v980 = vmul.f32 %v700, 0.01
    %v981 = vmul.f32 %v705, 0.01
    %v982 = vmul.f32 %v710, 0.01
    %v983 = vmul.f32 %v715, 0.01
    %v984 = vmul.f32 %v720, 0.01
    %v985 = vmul.f32 %v725, 0.01
    %v986 = vmul.f32 %v730, 0.01
    %v987 = vmul.f32 %v735, 0.01
    %v988 = vmul.f32 %v740, 0.01
    %v989 = vmul.f32 %v745, 0.01
    %v990 = vmul.f32 %v750, 0.01
    %v991 = vmul.f32 %v755, 0.01
    %v992 = vmul.f32 %v760, 0.01
    %v993 = vmul.f32 %v765, 0.01
    %v994 = vmul.f32 %v770, 0.01
    %v995 = vmul.f32 %v775, 0.01
    %v996 = vmul.f32 %v780, 0.01
    %v997 = vmul.f32 %v785, 0.01
    %v998 = vmul.f32 %v790, 0.01
    %v999 = vmul.f32 %v795, 0.01
    %v1000 = vmul.f32 %v800, 0.01
    %v1001 = vmul.f32 %v805, 0.01
    %v1002 = vmul.f32 %v810, 0.01
    %v1003 = vmul.f32 %v815, 0.01
    %v1004 = vmul.f32 %v820, 0.01
    %v1005 = vmul.f32 %v825, 0.01
    %v1006 = vmul.f32 %v830, 0.01
    %v1007 = vmul.f32 %v835, 0.01
    %v1008 = vmul.f32 %v840, 0.01
    %v1009 = vmul.f32 %v845, 0.01
    %v1010 = vsel %vm848, %v445, %v929
    %v1011 = vsel %vm849, %v450, %v930
    %v1012 = vsel %vm850, %v455, %v931
    %v1013 = vsel %vm851, %v460, %v932
    %v1014 = vsel %vm852, %v465, %v933
    %v1015 = vsel %vm853, %v470, %v934
    %v1016 = vsel %vm854, %v475, %v935
    %v1017 = vsel %vm855, %v480, %v936
    %v1018 = vsel %vm856, %v485, %v937
    %v1019 = vsel %vm857, %v490, %v938
    %v1020 = vsel %vm858, %v495, %v939
    %v1021 = vsel %vm859, %v500, %v940
    %v1022 = vsel %vm860, %v505, %v941
    %v1023 = vsel %vm861, %v510, %v942
    %v1024 = vsel %vm862, %v515, %v943
    %v1025 = vsel %vm863, %v520, %v944
    %v1026 = vsel %vm864, %v525, %v945
    %v1027 = vsel %vm865, %v530, %v946
    %v1028 = vsel %vm866, %v535, %v947
    %v1029 = vsel %vm867, %v540, %v948
    %v1030 = vsel %vm868, %v545, %v949
    %v1031 = vsel %vm869, %v550, %v950
    %v1032 = vsel %vm870, %v555, %v951
    %v1033 = vsel %vm871, %v560, %v952
    %v1034 = vsel %vm872, %v565, %v953
    %v1035 = vsel %vm873, %v570, %v954
    %v1036 = vsel %vm874, %v575, %v955
    %v1037 = vsel %vm875, %v580, %v956
    %v1038 = vsel %vm876, %v585, %v957
    %v1039 = vsel %vm877, %v590, %v958
    %v1040 = vsel %vm878, %v595, %v959
    %v1041 = vsel %vm879, %v600, %v960
    %v1042 = vsel %vm880, %v605, %v961
    %v1043 = vsel %vm881, %v610, %v962
    %v1044 = vsel %vm882, %v615, %v963
    %v1045 = vsel %vm883, %v620, %v964
    %v1046 = vsel %vm884, %v625, %v965
    %v1047 = vsel %vm885, %v630, %v966
    %v1048 = vsel %vm886, %v635, %v967
    %v1049 = vsel %vm887, %v640, %v968
    %v1050 = vsel %vm888, %v645, %v969
    %v1051 = vsel %vm889, %v650, %v970
    %v1052 = vsel %vm890, %v655, %v971
    %v1053 = vsel %vm891, %v660, %v972
    %v1054 = vsel %vm892, %v665, %v973
    %v1055 = vsel %vm893, %v670, %v974
    %v1056 = vsel %vm894, %v675, %v975
    %v1057 = vsel %vm895, %v680, %v976
    %v1058 = vsel %vm896, %v685, %v977
    %v1059 = vsel %vm897, %v690, %v978
    %v1060 = vsel %vm898, %v695, %v979
    %v1061 = vsel %vm899, %v700, %v980
    %v1062 = vsel %vm900, %v705, %v981
    %v1063 = vsel %vm901, %v710, %v982
    %v1064 = vsel %vm902, %v715, %v983
    %v1065 = vsel %vm903, %v720, %v984
    %v1066 = vsel %vm904, %v725, %v985
    %v1067 = vsel %vm905, %v730, %v986
    %v1068 = vsel %vm906, %v735, %v987
    %v1069 = vsel %vm907, %v740, %v988
    %v1070 = vsel %vm908, %v745, %v989
    %v1071 = vsel %vm909, %v750, %v990
    %v1072 = vsel %vm910, %v755, %v991
    %v1073 = vsel %vm911, %v760, %v992
    %v1074 = vsel %vm912, %v765, %v993
    %v1075 = vsel %vm913, %v770, %v994
    %v1076 = vsel %vm914, %v775, %v995
    %v1077 = vsel %vm915, %v780, %v996
    %v1078 = vsel %vm916, %v785, %v997
    %v1079 = vsel %vm917, %v790, %v998
    %v1080 = vsel %vm918, %v795, %v999
    %v1081 = vsel %vm919, %v800, %v1000
    %v1082 = vsel %vm920, %v805, %v1001
    %v1083 = vsel %vm921, %v810, %v1002
    %v1084 = vsel %vm922, %v815, %v1003
    %v1085 = vsel %vm923, %v820, %v1004
    %v1086 = vsel %vm924, %v825, %v1005
    %v1087 = vsel %vm925, %v830, %v1006
    %v1088 = vsel %vm926, %v835, %v1007
    %v1089 = vsel %vm927, %v840, %v1008
    %v1090 = vsel %vm928, %v845, %v1009
    %vm1091 = vcmask 97280
    %1092 = vst.msk [vmem:[%s3] sm:$0xff] %vm1091, %v1010
    %1093 = vst.msk [vmem:[%s3 + $0x8] sm:$0xff] %vm1091, %v1011
    %1094 = vst.msk [vmem:[%s3 + $0x10] sm:$0xff] %vm1091, %v1012
    %1095 = vst.msk [vmem:[%s3 + $0x18] sm:$0xff] %vm1091, %v1013
    %1096 = vst.msk [vmem:[%s3 + $0x20] sm:$0xff] %vm1091, %v1014
    %1097 = vst.msk [vmem:[%s3 + $0x28] sm:$0xff] %vm1091, %v1015
    %1098 = vst.msk [vmem:[%s3 + $0x30] sm:$0xff] %vm1091, %v1016
    %1099 = vst.msk [vmem:[%s3 + $0x38] sm:$0xff] %vm1091, %v1017
    %1100 = vst.msk [vmem:[%s3 + $0x40] sm:$0xff] %vm1091, %v1018
    %1101 = vst.msk [vmem:[%s3 + $0x48] sm:$0xff] %vm1091, %v1019
    %1102 = vst.msk [vmem:[%s3 + $0x50] sm:$0xff] %vm1091, %v1020
    %1103 = vst.msk [vmem:[%s3 + $0x58] sm:$0xff] %vm1091, %v1021
    %1104 = vst.msk [vmem:[%s3 + $0x60] sm:$0xff] %vm1091, %v1022
    %1105 = vst.msk [vmem:[%s3 + $0x68] sm:$0xff] %vm1091, %v1023
    %1106 = vst.msk [vmem:[%s3 + $0x70] sm:$0xff] %vm1091, %v1024
    %1107 = vst.msk [vmem:[%s3 + $0x78] sm:$0xff] %vm1091, %v1025
    %1108 = vst.msk [vmem:[%s3 + $0x80] sm:$0xff] %vm1091, %v1026
    %1109 = vst.msk [vmem:[%s3 + $0x88] sm:$0xff] %vm1091, %v1027
    %1110 = vst.msk [vmem:[%s3 + $0x90] sm:$0xff] %vm1091, %v1028
    %1111 = vst.msk [vmem:[%s3 + $0x98] sm:$0xff] %vm1091, %v1029
    %1112 = vst.msk [vmem:[%s3 + $0xa0] sm:$0xff] %vm1091, %v1030
    %1113 = vst.msk [vmem:[%s3 + $0xa8] sm:$0xff] %vm1091, %v1031
    %1114 = vst.msk [vmem:[%s3 + $0xb0] sm:$0xff] %vm1091, %v1032
    %1115 = vst.msk [vmem:[%s3 + $0xb8] sm:$0xff] %vm1091, %v1033
    %1116 = vst.msk [vmem:[%s3 + $0xc0] sm:$0xff] %vm1091, %v1034
    %1117 = vst.msk [vmem:[%s3 + $0xc8] sm:$0xff] %vm1091, %v1035
    %1118 = vst.msk [vmem:[%s3 + $0xd0] sm:$0xff] %vm1091, %v1036
    %1119 = vst.msk [vmem:[%s3 + $0xd8] sm:$0xff] %vm1091, %v1037
    %1120 = vst.msk [vmem:[%s3 + $0xe0] sm:$0xff] %vm1091, %v1038
    %1121 = vst.msk [vmem:[%s3 + $0xe8] sm:$0xff] %vm1091, %v1039
    %1122 = vst.msk [vmem:[%s3 + $0xf0] sm:$0xff] %vm1091, %v1040
    %1123 = vst.msk [vmem:[%s3 + $0xf8] sm:$0xff] %vm1091, %v1041
    %1124 = vst.msk [vmem:[%s3 + $0x100] sm:$0xff] %vm1091, %v1042
    %1125 = vst.msk [vmem:[%s3 + $0x108] sm:$0xff] %vm1091, %v1043
    %1126 = vst.msk [vmem:[%s3 + $0x110] sm:$0xff] %vm1091, %v1044
    %1127 = vst.msk [vmem:[%s3 + $0x118] sm:$0xff] %vm1091, %v1045
    %1128 = vst.msk [vmem:[%s3 + $0x120] sm:$0xff] %vm1091, %v1046
    %1129 = vst.msk [vmem:[%s3 + $0x128] sm:$0xff] %vm1091, %v1047
    %1130 = vst.msk [vmem:[%s3 + $0x130] sm:$0xff] %vm1091, %v1048
    %1131 = vst.msk [vmem:[%s3 + $0x138] sm:$0xff] %vm1091, %v1049
    %1132 = vst.msk [vmem:[%s3 + $0x140] sm:$0xff] %vm1091, %v1050
    %1133 = vst.msk [vmem:[%s3 + $0x148] sm:$0xff] %vm1091, %v1051
    %1134 = vst.msk [vmem:[%s3 + $0x150] sm:$0xff] %vm1091, %v1052
    %1135 = vst.msk [vmem:[%s3 + $0x158] sm:$0xff] %vm1091, %v1053
    %1136 = vst.msk [vmem:[%s3 + $0x160] sm:$0xff] %vm1091, %v1054
    %1137 = vst.msk [vmem:[%s3 + $0x168] sm:$0xff] %vm1091, %v1055
    %1138 = vst.msk [vmem:[%s3 + $0x170] sm:$0xff] %vm1091, %v1056
    %1139 = vst.msk [vmem:[%s3 + $0x178] sm:$0xff] %vm1091, %v1057
    %1140 = vst.msk [vmem:[%s3 + $0x180] sm:$0xff] %vm1091, %v1058
    %1141 = vst.msk [vmem:[%s3 + $0x188] sm:$0xff] %vm1091, %v1059
    %1142 = vst.msk [vmem:[%s3 + $0x190] sm:$0xff] %vm1091, %v1060
    %1143 = vst.msk [vmem:[%s3 + $0x198] sm:$0xff] %vm1091, %v1061
    %1144 = vst.msk [vmem:[%s3 + $0x1a0] sm:$0xff] %vm1091, %v1062
    %1145 = vst.msk [vmem:[%s3 + $0x1a8] sm:$0xff] %vm1091, %v1063
    %1146 = vst.msk [vmem:[%s3 + $0x1b0] sm:$0xff] %vm1091, %v1064
    %1147 = vst.msk [vmem:[%s3 + $0x1b8] sm:$0xff] %vm1091, %v1065
    %1148 = vst.msk [vmem:[%s3 + $0x1c0] sm:$0xff] %vm1091, %v1066
    %1149 = vst.msk [vmem:[%s3 + $0x1c8] sm:$0xff] %vm1091, %v1067
    %1150 = vst.msk [vmem:[%s3 + $0x1d0] sm:$0xff] %vm1091, %v1068
    %1151 = vst.msk [vmem:[%s3 + $0x1d8] sm:$0xff] %vm1091, %v1069
    %1152 = vst.msk [vmem:[%s3 + $0x1e0] sm:$0xff] %vm1091, %v1070
    %1153 = vst.msk [vmem:[%s3 + $0x1e8] sm:$0xff] %vm1091, %v1071
    %1154 = vst.msk [vmem:[%s3 + $0x1f0] sm:$0xff] %vm1091, %v1072
    %1155 = vst.msk [vmem:[%s3 + $0x1f8] sm:$0xff] %vm1091, %v1073
    %1156 = vst.msk [vmem:[%s3 + $0x200] sm:$0xff] %vm1091, %v1074
    %1157 = vst.msk [vmem:[%s3 + $0x208] sm:$0xff] %vm1091, %v1075
    %1158 = vst.msk [vmem:[%s3 + $0x210] sm:$0xff] %vm1091, %v1076
    %1159 = vst.msk [vmem:[%s3 + $0x218] sm:$0xff] %vm1091, %v1077
    %1160 = vst.msk [vmem:[%s3 + $0x220] sm:$0xff] %vm1091, %v1078
    %1161 = vst.msk [vmem:[%s3 + $0x228] sm:$0xff] %vm1091, %v1079
    %1162 = vst.msk [vmem:[%s3 + $0x230] sm:$0xff] %vm1091, %v1080
    %1163 = vst.msk [vmem:[%s3 + $0x238] sm:$0xff] %vm1091, %v1081
    %1164 = vst.msk [vmem:[%s3 + $0x240] sm:$0xff] %vm1091, %v1082
    %1165 = vst.msk [vmem:[%s3 + $0x248] sm:$0xff] %vm1091, %v1083
    %1166 = vst.msk [vmem:[%s3 + $0x250] sm:$0xff] %vm1091, %v1084
    %1167 = vst.msk [vmem:[%s3 + $0x258] sm:$0xff] %vm1091, %v1085
    %1168 = vst.msk [vmem:[%s3 + $0x260] sm:$0xff] %vm1091, %v1086
    %1169 = vst.msk [vmem:[%s3 + $0x268] sm:$0xff] %vm1091, %v1087
    %1170 = vst.msk [vmem:[%s3 + $0x270] sm:$0xff] %vm1091, %v1088
    %1171 = vst.msk [vmem:[%s3 + $0x278] sm:$0xff] %vm1091, %v1089
    %1172 = vst.msk [vmem:[%s3 + $0x280] sm:$0xff] %vm1091, %v1090
    // Predicated region
    $region22: #{forward.5} parent=1 // pred_check
      _
    $region23: #{forward.5} parent=1 // pred_check_branch
      %1174 = sbr.rel (0) target = $region25
    $region24: #{forward.5} parent=1 // pred_region
      _
    $region25: #{forward.5} parent=1 // pred_fallthru
      _
    // Predicated region
    $region26: #{forward.5} parent=1 // pred_check
      _
    $region27: #{forward.5} parent=1 // pred_check_branch
      %1176 = sbr.rel (0) target = $region29
    $region28: #{forward.5} parent=1 // pred_region
      _
    $region29: #{forward.5} parent=1 // pred_fallthru
      _
    %1177 = vsyncpa [#allocation3], 1
    %1178 = vsyncpa [#allocation5], 1

// kernel: forward.7
$region0: #{forward.7}
  #allocation0 [shape = 'u32[]', space=smem, size = 0x4, offset = 0x4, fixed_abs, tag = 'smem constant byte address 0x4 - core index']
  #allocation1 [shape = 'u32[144,128]{1,0:T(1,128)}', space=vmem, size = 0x12000, scoped, tag = 'internal scratch']
  %s0 = inlined_call_operand.vmem [shape: f32[248,108], index: 0, kind: input, shape index: {}]
  %s1 = inlined_call_operand.vmem [shape: f32[108,16], index: 1, kind: input, shape index: {}]
  %s2 = inlined_call_operand.vmem [shape: f32[1,16], index: 2, kind: input, shape index: {}]
  %s3 = inlined_call_operand.vmem [shape: f32[248,16], index: 3, kind: output, shape index: {}]
  %s4 = sld [smem:[#allocation0]]
  $region22: #{forward.7} parent=0
    _
  %s6 = ssub.s32 1, %s4
  %s7 = scalar_select 0, %s6, %s4
  // Predicated region
  $region2: #{forward.7} parent=0 // pred_check
    _
  $region3: #{forward.7} parent=0 // pred_check_branch
    %9 = sbr.rel (0) target = $region5
  $region4: #{forward.7} parent=0 // pred_region
    _
  $region5: #{forward.7} parent=0 // pred_fallthru
    _
  // Predicated region
  $region6: #{forward.7} parent=0 // pred_check
    _
  $region7: #{forward.7} parent=0 // pred_check_branch
    %11 = sbr.rel (0) target = $region9
  $region8: #{forward.7} parent=0 // pred_region
    _
  $region9: #{forward.7} parent=0 // pred_fallthru
    _
  // Predicated region
  $region10: #{forward.7} parent=0 // pred_check
    _
  $region11: #{forward.7} parent=0 // pred_check_branch
    %13 = sbr.rel (0) target = $region13
  $region12: #{forward.7} parent=0 // pred_region
    _
  $region13: #{forward.7} parent=0 // pred_fallthru
    _
  %v14 = vld [vmem:[%s0] sm:$0xff]
  %v15 = vld [vmem:[%s0 + $0x8] sm:$0xff]
  %v16 = vld [vmem:[%s0 + $0x10] sm:$0xff]
  %v17 = vld [vmem:[%s0 + $0x18] sm:$0xff]
  %v18 = vld [vmem:[%s0 + $0x20] sm:$0xff]
  %v19 = vld [vmem:[%s0 + $0x28] sm:$0xff]
  %v20 = vld [vmem:[%s0 + $0x30] sm:$0xff]
  %v21 = vld [vmem:[%s0 + $0x38] sm:$0xff]
  %v22 = vld [vmem:[%s0 + $0x40] sm:$0xff]
  %v23 = vld [vmem:[%s0 + $0x48] sm:$0xff]
  %v24 = vld [vmem:[%s0 + $0x50] sm:$0xff]
  %v25 = vld [vmem:[%s0 + $0x58] sm:$0xff]
  %v26 = vld [vmem:[%s0 + $0x60] sm:$0xff]
  %v27 = vld [vmem:[%s0 + $0x68] sm:$0xff]
  %v28 = vld [vmem:[%s0 + $0x70] sm:$0xff]
  %v29 = vld [vmem:[%s0 + $0x78] sm:$0xff]
  %v30 = vld [vmem:[%s0 + $0x80] sm:$0xff]
  %v31 = vld [vmem:[%s0 + $0x88] sm:$0xff]
  %v32 = vld [vmem:[%s0 + $0x90] sm:$0xff]
  %v33 = vld [vmem:[%s0 + $0x98] sm:$0xff]
  %v34 = vld [vmem:[%s0 + $0xa0] sm:$0xff]
  %v35 = vld [vmem:[%s0 + $0xa8] sm:$0xff]
  %v36 = vld [vmem:[%s0 + $0xb0] sm:$0xff]
  %v37 = vld [vmem:[%s0 + $0xb8] sm:$0xff]
  %v38 = vld [vmem:[%s0 + $0xc0] sm:$0xff]
  %v39 = vld [vmem:[%s0 + $0xc8] sm:$0xff]
  %v40 = vld [vmem:[%s0 + $0xd0] sm:$0xff]
  %v41 = vld [vmem:[%s0 + $0xd8] sm:$0xff]
  %v42 = vld [vmem:[%s0 + $0xe0] sm:$0xff]
  %v43 = vld [vmem:[%s0 + $0xe8] sm:$0xff]
  %v44 = vld [vmem:[%s0 + $0xf0] sm:$0xff]
  %v45 = vld [vmem:[%s1] sm:$0xff]
  %v46 = vld [vmem:[%s1 + $0x8] sm:$0xff]
  %v47 = vld [vmem:[%s1 + $0x10] sm:$0xff]
  %v48 = vld [vmem:[%s1 + $0x18] sm:$0xff]
  %v49 = vld [vmem:[%s1 + $0x20] sm:$0xff]
  %v50 = vld [vmem:[%s1 + $0x28] sm:$0xff]
  %v51 = vld [vmem:[%s1 + $0x30] sm:$0xff]
  %v52 = vld [vmem:[%s1 + $0x38] sm:$0xff]
  %v53 = vld [vmem:[%s1 + $0x40] sm:$0xff]
  %v54 = vld [vmem:[%s1 + $0x48] sm:$0xff]
  %v55 = vld [vmem:[%s1 + $0x50] sm:$0xff]
  %v56 = vld [vmem:[%s1 + $0x58] sm:$0xff]
  %v57 = vld [vmem:[%s1 + $0x60] sm:$0xff]
  %v58 = vld [vmem:[%s1 + $0x68] sm:$0xf]
  %v59 = vld [vmem:[%s2] sm:$0x1]
  %v61 = vlaneseq
  %v62 = vshrl.u32 %v61, 7
  %v63 = vsub.s32 0, %v62
  %v64 = vrot.slane %v59, %v63
  %vm66 = vcmask 883712
  %v68 = vsel %vm66, %v14, 0
  %v71 = vsel %vm66, %v15, 0
  %v74 = vsel %vm66, %v16, 0
  %v77 = vsel %vm66, %v17, 0
  %v80 = vsel %vm66, %v18, 0
  %v83 = vsel %vm66, %v19, 0
  %v86 = vsel %vm66, %v20, 0
  %v89 = vsel %vm66, %v21, 0
  %v92 = vsel %vm66, %v22, 0
  %v95 = vsel %vm66, %v23, 0
  %v98 = vsel %vm66, %v24, 0
  %v101 = vsel %vm66, %v25, 0
  %v104 = vsel %vm66, %v26, 0
  %v107 = vsel %vm66, %v27, 0
  %v110 = vsel %vm66, %v28, 0
  %v113 = vsel %vm66, %v29, 0
  %v116 = vsel %vm66, %v30, 0
  %v119 = vsel %vm66, %v31, 0
  %v122 = vsel %vm66, %v32, 0
  %v125 = vsel %vm66, %v33, 0
  %v128 = vsel %vm66, %v34, 0
  %v131 = vsel %vm66, %v35, 0
  %v134 = vsel %vm66, %v36, 0
  %v137 = vsel %vm66, %v37, 0
  %v140 = vsel %vm66, %v38, 0
  %v143 = vsel %vm66, %v39, 0
  %v146 = vsel %vm66, %v40, 0
  %v149 = vsel %vm66, %v41, 0
  %v152 = vsel %vm66, %v42, 0
  %v155 = vsel %vm66, %v43, 0
  %v158 = vsel %vm66, %v44, 0
  %vm160 = vcmask 1043456
  %v162 = vsel %vm160, %v58, 0
  %164 = vmatprep.subr.mxu0 0.0
  %165 = vmatpush1.msra.mxu0 %v45
  %166 = vmatprep.subr.mxu0 0.0
  %167 = vmatpush1.msra.mxu0 %v46
  %168 = vmatprep.subr.mxu0 0.0
  %169 = vmatpush1.msra.mxu0 %v47
  %170 = vmatprep.subr.mxu0 0.0
  %171 = vmatpush1.msra.mxu0 %v48
  %172 = vmatprep.subr.mxu0 0.0
  %173 = vmatpush1.msra.mxu0 %v49
  %174 = vmatprep.subr.mxu0 0.0
  %175 = vmatpush1.msra.mxu0 %v50
  %176 = vmatprep.subr.mxu0 0.0
  %177 = vmatpush1.msra.mxu0 %v51
  %178 = vmatprep.subr.mxu0 0.0
  %179 = vmatpush1.msra.mxu0 %v52
  %180 = vmatprep.subr.mxu0 0.0
  %181 = vmatpush1.msra.mxu0 %v53
  %182 = vmatprep.subr.mxu0 0.0
  %183 = vmatpush1.msra.mxu0 %v54
  %184 = vmatprep.subr.mxu0 0.0
  %185 = vmatpush1.msra.mxu0 %v55
  %186 = vmatprep.subr.mxu0 0.0
  %187 = vmatpush1.msra.mxu0 %v56
  %188 = vmatprep.subr.mxu0 0.0
  %189 = vmatpush1.msra.mxu0 %v57
  %190 = vmatprep.subr.mxu0 0.0
  %191 = vmatpush1.msra.mxu0 %v162
  %192 = vmatprep.subr.mxu0 0.0
  %193 = vmatpush1.msra.mxu0 0.0
  %194 = vmatprep.subr.mxu0 0.0
  %195 = vmatpush1.msra.mxu0 0.0
  %196 = vmatprep.subr.mxu0 0.0
  %197 = vmatpush1.msra.mxu0 0.0
  %198 = vmatprep.subr.mxu0 0.0
  %199 = vmatpush1.msra.mxu0 0.0
  %200 = vmatprep.subr.mxu0 0.0
  %201 = vmatpush1.msra.mxu0 0.0
  %202 = vmatprep.subr.mxu0 0.0
  %203 = vmatpush1.msra.mxu0 0.0
  %204 = vmatprep.subr.mxu0 0.0
  %205 = vmatpush1.msra.mxu0 0.0
  %206 = vmatprep.subr.mxu0 0.0
  %207 = vmatpush1.msra.mxu0 0.0
  %208 = vmatprep.subr.mxu0 0.0
  %209 = vmatpush1.msra.mxu0 0.0
  %210 = vmatprep.subr.mxu0 0.0
  %211 = vmatpush1.msra.mxu0 0.0
  %212 = vmatprep.subr.mxu0 0.0
  %213 = vmatpush1.msra.mxu0 0.0
  %214 = vmatprep.subr.mxu0 0.0
  %215 = vmatpush1.msra.mxu0 0.0
  %216 = vmatprep.subr.mxu0 0.0
  %217 = vmatpush1.msra.mxu0 0.0
  %218 = vmatprep.subr.mxu0 0.0
  %219 = vmatpush1.msra.mxu0 0.0
  %220 = vmatprep.subr.mxu0 0.0
  %221 = vmatpush1.msra.mxu0 0.0
  %222 = vmatprep.subr.mxu0 0.0
  %223 = vmatpush1.msra.mxu0 0.0
  %224 = vmatprep.subr.mxu0 0.0
  %225 = vmatpush1.msra.mxu0 0.0
  %226 = vmatprep.subr.mxu0 0.0
  %227 = vmatpush1.msra.mxu0 0.0
  %228 = vmatprep.mubr.f32.mxu0 0.0
  %229 = vmatmul.mubr.f32.gmra.mrb[0].mxu0 %v68
  %v230 = vpop.f32.mrb[0].mxu0
  %v231 = vadd.f32 %v64, %v230
  %v232 = vpop.f32.mrb[0].mxu0
  %233 = vmatprep.mubr.f32.mxu0 0.0
  %234 = vmatmul.mubr.f32.gmra.mrb[0].mxu0 %v71
  %v235 = vpop.f32.mrb[0].mxu0
  %v236 = vadd.f32 %v64, %v235
  %v237 = vpop.f32.mrb[0].mxu0
  %238 = vmatprep.mubr.f32.mxu0 0.0
  %239 = vmatmul.mubr.f32.gmra.mrb[0].mxu0 %v74
  %v240 = vpop.f32.mrb[0].mxu0
  %v241 = vadd.f32 %v64, %v240
  %v242 = vpop.f32.mrb[0].mxu0
  %243 = vmatprep.mubr.f32.mxu0 0.0
  %244 = vmatmul.mubr.f32.gmra.mrb[0].mxu0 %v77
  %v245 = vpop.f32.mrb[0].mxu0
  %v246 = vadd.f32 %v64, %v245
  %v247 = vpop.f32.mrb[0].mxu0
  %248 = vmatprep.mubr.f32.mxu0 0.0
  %249 = vmatmul.mubr.f32.gmra.mrb[0].mxu0 %v80
  %v250 = vpop.f32.mrb[0].mxu0
  %v251 = vadd.f32 %v64, %v250
  %v252 = vpop.f32.mrb[0].mxu0
  %253 = vmatprep.mubr.f32.mxu0 0.0
  %254 = vmatmul.mubr.f32.gmra.mrb[0].mxu0 %v83
  %v255 = vpop.f32.mrb[0].mxu0
  %v256 = vadd.f32 %v64, %v255
  %v257 = vpop.f32.mrb[0].mxu0
  %258 = vmatprep.mubr.f32.mxu0 0.0
  %259 = vmatmul.mubr.f32.gmra.mrb[0].mxu0 %v86
  %v260 = vpop.f32.mrb[0].mxu0
  %v261 = vadd.f32 %v64, %v260
  %v262 = vpop.f32.mrb[0].mxu0
  %263 = vmatprep.mubr.f32.mxu0 0.0
  %264 = vmatmul.mubr.f32.gmra.mrb[0].mxu0 %v89
  %v265 = vpop.f32.mrb[0].mxu0
  %v266 = vadd.f32 %v64, %v265
  %v267 = vpop.f32.mrb[0].mxu0
  %268 = vmatprep.mubr.f32.mxu0 0.0
  %269 = vmatmul.mubr.f32.gmra.mrb[0].mxu0 %v92
  %v270 = vpop.f32.mrb[0].mxu0
  %v271 = vadd.f32 %v64, %v270
  %v272 = vpop.f32.mrb[0].mxu0
  %273 = vmatprep.mubr.f32.mxu0 0.0
  %274 = vmatmul.mubr.f32.gmra.mrb[0].mxu0 %v95
  %v275 = vpop.f32.mrb[0].mxu0
  %v276 = vadd.f32 %v64, %v275
  %v277 = vpop.f32.mrb[0].mxu0
  %278 = vmatprep.mubr.f32.mxu0 0.0
  %279 = vmatmul.mubr.f32.gmra.mrb[0].mxu0 %v98
  %v280 = vpop.f32.mrb[0].mxu0
  %v281 = vadd.f32 %v64, %v280
  %v282 = vpop.f32.mrb[0].mxu0
  %283 = vmatprep.mubr.f32.mxu0 0.0
  %284 = vmatmul.mubr.f32.gmra.mrb[0].mxu0 %v101
  %v285 = vpop.f32.mrb[0].mxu0
  %v286 = vadd.f32 %v64, %v285
  %v287 = vpop.f32.mrb[0].mxu0
  %288 = vmatprep.mubr.f32.mxu0 0.0
  %289 = vmatmul.mubr.f32.gmra.mrb[0].mxu0 %v104
  %v290 = vpop.f32.mrb[0].mxu0
  %v291 = vadd.f32 %v64, %v290
  %v292 = vpop.f32.mrb[0].mxu0
  %293 = vmatprep.mubr.f32.mxu0 0.0
  %294 = vmatmul.mubr.f32.gmra.mrb[0].mxu0 %v107
  %v295 = vpop.f32.mrb[0].mxu0
  %v296 = vadd.f32 %v64, %v295
  %v297 = vpop.f32.mrb[0].mxu0
  %298 = vmatprep.mubr.f32.mxu0 0.0
  %299 = vmatmul.mubr.f32.gmra.mrb[0].mxu0 %v110
  %v300 = vpop.f32.mrb[0].mxu0
  %v301 = vadd.f32 %v64, %v300
  %v302 = vpop.f32.mrb[0].mxu0
  %303 = vmatprep.mubr.f32.mxu0 0.0
  %304 = vmatmul.mubr.f32.gmra.mrb[0].mxu0 %v113
  %v305 = vpop.f32.mrb[0].mxu0
  %v306 = vadd.f32 %v64, %v305
  %v307 = vpop.f32.mrb[0].mxu0
  %308 = vmatprep.mubr.f32.mxu0 0.0
  %309 = vmatmul.mubr.f32.gmra.mrb[0].mxu0 %v116
  %v310 = vpop.f32.mrb[0].mxu0
  %v311 = vadd.f32 %v64, %v310
  %v312 = vpop.f32.mrb[0].mxu0
  %313 = vmatprep.mubr.f32.mxu0 0.0
  %314 = vmatmul.mubr.f32.gmra.mrb[0].mxu0 %v119
  %v315 = vpop.f32.mrb[0].mxu0
  %v316 = vadd.f32 %v64, %v315
  %v317 = vpop.f32.mrb[0].mxu0
  %318 = vmatprep.mubr.f32.mxu0 0.0
  %319 = vmatmul.mubr.f32.gmra.mrb[0].mxu0 %v122
  %v320 = vpop.f32.mrb[0].mxu0
  %v321 = vadd.f32 %v64, %v320
  %v322 = vpop.f32.mrb[0].mxu0
  %323 = vmatprep.mubr.f32.mxu0 0.0
  %324 = vmatmul.mubr.f32.gmra.mrb[0].mxu0 %v125
  %v325 = vpop.f32.mrb[0].mxu0
  %v326 = vadd.f32 %v64, %v325
  %v327 = vpop.f32.mrb[0].mxu0
  %328 = vmatprep.mubr.f32.mxu0 0.0
  %329 = vmatmul.mubr.f32.gmra.mrb[0].mxu0 %v128
  %v330 = vpop.f32.mrb[0].mxu0
  %v331 = vadd.f32 %v64, %v330
  %v332 = vpop.f32.mrb[0].mxu0
  %333 = vmatprep.mubr.f32.mxu0 0.0
  %334 = vmatmul.mubr.f32.gmra.mrb[0].mxu0 %v131
  %v335 = vpop.f32.mrb[0].mxu0
  %v336 = vadd.f32 %v64, %v335
  %v337 = vpop.f32.mrb[0].mxu0
  %338 = vmatprep.mubr.f32.mxu0 0.0
  %339 = vmatmul.mubr.f32.gmra.mrb[0].mxu0 %v134
  %v340 = vpop.f32.mrb[0].mxu0
  %v341 = vadd.f32 %v64, %v340
  %v342 = vpop.f32.mrb[0].mxu0
  %343 = vmatprep.mubr.f32.mxu0 0.0
  %344 = vmatmul.mubr.f32.gmra.mrb[0].mxu0 %v137
  %v345 = vpop.f32.mrb[0].mxu0
  %v346 = vadd.f32 %v64, %v345
  %v347 = vpop.f32.mrb[0].mxu0
  %348 = vmatprep.mubr.f32.mxu0 0.0
  %349 = vmatmul.mubr.f32.gmra.mrb[0].mxu0 %v140
  %v350 = vpop.f32.mrb[0].mxu0
  %v351 = vadd.f32 %v64, %v350
  %v352 = vpop.f32.mrb[0].mxu0
  %353 = vmatprep.mubr.f32.mxu0 0.0
  %354 = vmatmul.mubr.f32.gmra.mrb[0].mxu0 %v143
  %v355 = vpop.f32.mrb[0].mxu0
  %v356 = vadd.f32 %v64, %v355
  %v357 = vpop.f32.mrb[0].mxu0
  %358 = vmatprep.mubr.f32.mxu0 0.0
  %359 = vmatmul.mubr.f32.gmra.mrb[0].mxu0 %v146
  %v360 = vpop.f32.mrb[0].mxu0
  %v361 = vadd.f32 %v64, %v360
  %v362 = vpop.f32.mrb[0].mxu0
  %363 = vmatprep.mubr.f32.mxu0 0.0
  %364 = vmatmul.mubr.f32.gmra.mrb[0].mxu0 %v149
  %v365 = vpop.f32.mrb[0].mxu0
  %v366 = vadd.f32 %v64, %v365
  %v367 = vpop.f32.mrb[0].mxu0
  %368 = vmatprep.mubr.f32.mxu0 0.0
  %369 = vmatmul.mubr.f32.gmra.mrb[0].mxu0 %v152
  %v370 = vpop.f32.mrb[0].mxu0
  %v371 = vadd.f32 %v64, %v370
  %v372 = vpop.f32.mrb[0].mxu0
  %373 = vmatprep.mubr.f32.mxu0 0.0
  %374 = vmatmul.mubr.f32.gmra.mrb[0].mxu0 %v155
  %v375 = vpop.f32.mrb[0].mxu0
  %v376 = vadd.f32 %v64, %v375
  %v377 = vpop.f32.mrb[0].mxu0
  %378 = vmatprep.mubr.f32.mxu0 0.0
  %379 = vmatmul.mubr.f32.gmra.mrb[0].mxu0 %v158
  %v380 = vpop.f32.mrb[0].mxu0
  %v381 = vadd.f32 %v64, %v380
  %v382 = vpop.f32.mrb[0].mxu0
  %383 = vdwg.mxu0
  %vm384 = vcmp.ge.f32.partialorder %v231, 0.0
  %vm385 = vcmp.ge.f32.partialorder %v236, 0.0
  %vm386 = vcmp.ge.f32.partialorder %v241, 0.0
  %vm387 = vcmp.ge.f32.partialorder %v246, 0.0
  %vm388 = vcmp.ge.f32.partialorder %v251, 0.0
  %vm389 = vcmp.ge.f32.partialorder %v256, 0.0
  %vm390 = vcmp.ge.f32.partialorder %v261, 0.0
  %vm391 = vcmp.ge.f32.partialorder %v266, 0.0
  %vm392 = vcmp.ge.f32.partialorder %v271, 0.0
  %vm393 = vcmp.ge.f32.partialorder %v276, 0.0
  %vm394 = vcmp.ge.f32.partialorder %v281, 0.0
  %vm395 = vcmp.ge.f32.partialorder %v286, 0.0
  %vm396 = vcmp.ge.f32.partialorder %v291, 0.0
  %vm397 = vcmp.ge.f32.partialorder %v296, 0.0
  %vm398 = vcmp.ge.f32.partialorder %v301, 0.0
  %vm399 = vcmp.ge.f32.partialorder %v306, 0.0
  %vm400 = vcmp.ge.f32.partialorder %v311, 0.0
  %vm401 = vcmp.ge.f32.partialorder %v316, 0.0
  %vm402 = vcmp.ge.f32.partialorder %v321, 0.0
  %vm403 = vcmp.ge.f32.partialorder %v326, 0.0
  %vm404 = vcmp.ge.f32.partialorder %v331, 0.0
  %vm405 = vcmp.ge.f32.partialorder %v336, 0.0
  %vm406 = vcmp.ge.f32.partialorder %v341, 0.0
  %vm407 = vcmp.ge.f32.partialorder %v346, 0.0
  %vm408 = vcmp.ge.f32.partialorder %v351, 0.0
  %vm409 = vcmp.ge.f32.partialorder %v356, 0.0
  %vm410 = vcmp.ge.f32.partialorder %v361, 0.0
  %vm411 = vcmp.ge.f32.partialorder %v366, 0.0
  %vm412 = vcmp.ge.f32.partialorder %v371, 0.0
  %vm413 = vcmp.ge.f32.partialorder %v376, 0.0
  %vm414 = vcmp.ge.f32.partialorder %v381, 0.0
  %v415 = vmul.f32 %v231, 0.01
  %v416 = vmul.f32 %v236, 0.01
  %v417 = vmul.f32 %v241, 0.01
  %v418 = vmul.f32 %v246, 0.01
  %v419 = vmul.f32 %v251, 0.01
  %v420 = vmul.f32 %v256, 0.01
  %v421 = vmul.f32 %v261, 0.01
  %v422 = vmul.f32 %v266, 0.01
  %v423 = vmul.f32 %v271, 0.01
  %v424 = vmul.f32 %v276, 0.01
  %v425 = vmul.f32 %v281, 0.01
  %v426 = vmul.f32 %v286, 0.01
  %v427 = vmul.f32 %v291, 0.01
  %v428 = vmul.f32 %v296, 0.01
  %v429 = vmul.f32 %v301, 0.01
  %v430 = vmul.f32 %v306, 0.01
  %v431 = vmul.f32 %v311, 0.01
  %v432 = vmul.f32 %v316, 0.01
  %v433 = vmul.f32 %v321, 0.01
  %v434 = vmul.f32 %v326, 0.01
  %v435 = vmul.f32 %v331, 0.01
  %v436 = vmul.f32 %v336, 0.01
  %v437 = vmul.f32 %v341, 0.01
  %v438 = vmul.f32 %v346, 0.01
  %v439 = vmul.f32 %v351, 0.01
  %v440 = vmul.f32 %v356, 0.01
  %v441 = vmul.f32 %v361, 0.01
  %v442 = vmul.f32 %v366, 0.01
  %v443 = vmul.f32 %v371, 0.01
  %v444 = vmul.f32 %v376, 0.01
  %v445 = vmul.f32 %v381, 0.01
  %v446 = vsel %vm384, %v231, %v415
  %v447 = vsel %vm385, %v236, %v416
  %v448 = vsel %vm386, %v241, %v417
  %v449 = vsel %vm387, %v246, %v418
  %v450 = vsel %vm388, %v251, %v419
  %v451 = vsel %vm389, %v256, %v420
  %v452 = vsel %vm390, %v261, %v421
  %v453 = vsel %vm391, %v266, %v422
  %v454 = vsel %vm392, %v271, %v423
  %v455 = vsel %vm393, %v276, %v424
  %v456 = vsel %vm394, %v281, %v425
  %v457 = vsel %vm395, %v286, %v426
  %v458 = vsel %vm396, %v291, %v427
  %v459 = vsel %vm397, %v296, %v428
  %v460 = vsel %vm398, %v301, %v429
  %v461 = vsel %vm399, %v306, %v430
  %v462 = vsel %vm400, %v311, %v431
  %v463 = vsel %vm401, %v316, %v432
  %v464 = vsel %vm402, %v321, %v433
  %v465 = vsel %vm403, %v326, %v434
  %v466 = vsel %vm404, %v331, %v435
  %v467 = vsel %vm405, %v336, %v436
  %v468 = vsel %vm406, %v341, %v437
  %v469 = vsel %vm407, %v346, %v438
  %v470 = vsel %vm408, %v351, %v439
  %v471 = vsel %vm409, %v356, %v440
  %v472 = vsel %vm410, %v361, %v441
  %v473 = vsel %vm411, %v366, %v442
  %v474 = vsel %vm412, %v371, %v443
  %v475 = vsel %vm413, %v376, %v444
  %v476 = vsel %vm414, %v381, %v445
  %vm477 = vcmask 130048
  %478 = vst.msk [vmem:[%s3] sm:$0xff] %vm477, %v446
  %479 = vst.msk [vmem:[%s3 + $0x8] sm:$0xff] %vm477, %v447
  %480 = vst.msk [vmem:[%s3 + $0x10] sm:$0xff] %vm477, %v448
  %481 = vst.msk [vmem:[%s3 + $0x18] sm:$0xff] %vm477, %v449
  %482 = vst.msk [vmem:[%s3 + $0x20] sm:$0xff] %vm477, %v450
  %483 = vst.msk [vmem:[%s3 + $0x28] sm:$0xff] %vm477, %v451
  %484 = vst.msk [vmem:[%s3 + $0x30] sm:$0xff] %vm477, %v452
  %485 = vst.msk [vmem:[%s3 + $0x38] sm:$0xff] %vm477, %v453
  %486 = vst.msk [vmem:[%s3 + $0x40] sm:$0xff] %vm477, %v454
  %487 = vst.msk [vmem:[%s3 + $0x48] sm:$0xff] %vm477, %v455
  %488 = vst.msk [vmem:[%s3 + $0x50] sm:$0xff] %vm477, %v456
  %489 = vst.msk [vmem:[%s3 + $0x58] sm:$0xff] %vm477, %v457
  %490 = vst.msk [vmem:[%s3 + $0x60] sm:$0xff] %vm477, %v458
  %491 = vst.msk [vmem:[%s3 + $0x68] sm:$0xff] %vm477, %v459
  %492 = vst.msk [vmem:[%s3 + $0x70] sm:$0xff] %vm477, %v460
  %493 = vst.msk [vmem:[%s3 + $0x78] sm:$0xff] %vm477, %v461
  %494 = vst.msk [vmem:[%s3 + $0x80] sm:$0xff] %vm477, %v462
  %495 = vst.msk [vmem:[%s3 + $0x88] sm:$0xff] %vm477, %v463
  %496 = vst.msk [vmem:[%s3 + $0x90] sm:$0xff] %vm477, %v464
  %497 = vst.msk [vmem:[%s3 + $0x98] sm:$0xff] %vm477, %v465
  %498 = vst.msk [vmem:[%s3 + $0xa0] sm:$0xff] %vm477, %v466
  %499 = vst.msk [vmem:[%s3 + $0xa8] sm:$0xff] %vm477, %v467
  %500 = vst.msk [vmem:[%s3 + $0xb0] sm:$0xff] %vm477, %v468
  %501 = vst.msk [vmem:[%s3 + $0xb8] sm:$0xff] %vm477, %v469
  %502 = vst.msk [vmem:[%s3 + $0xc0] sm:$0xff] %vm477, %v470
  %503 = vst.msk [vmem:[%s3 + $0xc8] sm:$0xff] %vm477, %v471
  %504 = vst.msk [vmem:[%s3 + $0xd0] sm:$0xff] %vm477, %v472
  %505 = vst.msk [vmem:[%s3 + $0xd8] sm:$0xff] %vm477, %v473
  %506 = vst.msk [vmem:[%s3 + $0xe0] sm:$0xff] %vm477, %v474
  %507 = vst.msk [vmem:[%s3 + $0xe8] sm:$0xff] %vm477, %v475
  %508 = vst.msk [vmem:[%s3 + $0xf0] sm:$0xff] %vm477, %v476
  // Predicated region
  $region14: #{forward.7} parent=0 // pred_check
    _
  $region15: #{forward.7} parent=0 // pred_check_branch
    %510 = sbr.rel (0) target = $region17
  $region16: #{forward.7} parent=0 // pred_region
    _
  $region17: #{forward.7} parent=0 // pred_fallthru
    _
  // Predicated region
  $region18: #{forward.7} parent=0 // pred_check
    _
  $region19: #{forward.7} parent=0 // pred_check_branch
    %512 = sbr.rel (0) target = $region21
  $region20: #{forward.7} parent=0 // pred_region
    _
  $region21: #{forward.7} parent=0 // pred_fallthru
    _

// kernel: forward.8
$region0: #{forward.8}
  #allocation0 [shape = 'u32[]', space=smem, size = 0x4, offset = 0x4, fixed_abs, tag = 'smem constant byte address 0x4 - core index']
  #allocation1 [shape = 'u32[144,128]{1,0:T(1,128)}', space=vmem, size = 0x12000, scoped, tag = 'internal scratch']
  %s0 = inlined_call_operand.vmem [shape: f32[4,56,16], index: 0, kind: input, shape index: {}]
  %s1 = inlined_call_operand.vmem [shape: f32[56,16], index: 1, kind: output, shape index: {}]
  %s2 = sld [smem:[#allocation0]]
  $region14: #{forward.8} parent=0
    _
  %s4 = ssub.s32 1, %s2
  %s5 = scalar_select 0, %s4, %s2
  // Predicated region
  $region2: #{forward.8} parent=0 // pred_check
    _
  $region3: #{forward.8} parent=0 // pred_check_branch
    %7 = sbr.rel (0) target = $region5
  $region4: #{forward.8} parent=0 // pred_region
    _
  $region5: #{forward.8} parent=0 // pred_fallthru
    _
  %v8 = vld [vmem:[%s0] sm:$0xff]
  %v9 = vld [vmem:[%s0 + $0x8] sm:$0xff]
  %v10 = vld [vmem:[%s0 + $0x10] sm:$0xff]
  %v11 = vld [vmem:[%s0 + $0x18] sm:$0xff]
  %v12 = vld [vmem:[%s0 + $0x20] sm:$0xff]
  %v13 = vld [vmem:[%s0 + $0x28] sm:$0xff]
  %v14 = vld [vmem:[%s0 + $0x30] sm:$0xff]
  %s15 = scalar_lea.vmem %s0, 56
  %v16 = vld [vmem:[%s15] sm:$0xff]
  %v17 = vld [vmem:[%s15 + $0x8] sm:$0xff]
  %v18 = vld [vmem:[%s15 + $0x10] sm:$0xff]
  %v19 = vld [vmem:[%s15 + $0x18] sm:$0xff]
  %v20 = vld [vmem:[%s15 + $0x20] sm:$0xff]
  %v21 = vld [vmem:[%s15 + $0x28] sm:$0xff]
  %v22 = vld [vmem:[%s15 + $0x30] sm:$0xff]
  %v23 = vmax.f32 %v8, %v16
  %v24 = vmax.f32 %v9, %v17
  %v25 = vmax.f32 %v10, %v18
  %v26 = vmax.f32 %v11, %v19
  %v27 = vmax.f32 %v12, %v20
  %v28 = vmax.f32 %v13, %v21
  %v29 = vmax.f32 %v14, %v22
  %s30 = scalar_lea.vmem %s0, 112
  %v31 = vld [vmem:[%s30] sm:$0xff]
  %v32 = vld [vmem:[%s30 + $0x8] sm:$0xff]
  %v33 = vld [vmem:[%s30 + $0x10] sm:$0xff]
  %v34 = vld [vmem:[%s30 + $0x18] sm:$0xff]
  %v35 = vld [vmem:[%s30 + $0x20] sm:$0xff]
  %v36 = vld [vmem:[%s30 + $0x28] sm:$0xff]
  %v37 = vld [vmem:[%s30 + $0x30] sm:$0xff]
  %s38 = scalar_lea.vmem %s0, 168
  %v39 = vld [vmem:[%s38] sm:$0xff]
  %v40 = vld [vmem:[%s38 + $0x8] sm:$0xff]
  %v41 = vld [vmem:[%s38 + $0x10] sm:$0xff]
  %v42 = vld [vmem:[%s38 + $0x18] sm:$0xff]
  %v43 = vld [vmem:[%s38 + $0x20] sm:$0xff]
  %v44 = vld [vmem:[%s38 + $0x28] sm:$0xff]
  %v45 = vld [vmem:[%s38 + $0x30] sm:$0xff]
  %v46 = vmax.f32 %v31, %v39
  %v47 = vmax.f32 %v32, %v40
  %v48 = vmax.f32 %v33, %v41
  %v49 = vmax.f32 %v34, %v42
  %v50 = vmax.f32 %v35, %v43
  %v51 = vmax.f32 %v36, %v44
  %v52 = vmax.f32 %v37, %v45
  %v53 = vmax.f32 %v23, %v46
  %v54 = vmax.f32 %v24, %v47
  %v55 = vmax.f32 %v25, %v48
  %v56 = vmax.f32 %v26, %v49
  %v57 = vmax.f32 %v27, %v50
  %v58 = vmax.f32 %v28, %v51
  %v59 = vmax.f32 %v29, %v52
  %vm60 = vcmask 130048
  %61 = vst.msk [vmem:[%s1] sm:$0xff] %vm60, %v53
  %62 = vst.msk [vmem:[%s1 + $0x8] sm:$0xff] %vm60, %v54
  %63 = vst.msk [vmem:[%s1 + $0x10] sm:$0xff] %vm60, %v55
  %64 = vst.msk [vmem:[%s1 + $0x18] sm:$0xff] %vm60, %v56
  %65 = vst.msk [vmem:[%s1 + $0x20] sm:$0xff] %vm60, %v57
  %66 = vst.msk [vmem:[%s1 + $0x28] sm:$0xff] %vm60, %v58
  %67 = vst.msk [vmem:[%s1 + $0x30] sm:$0xff] %vm60, %v59
  // Predicated region
  $region6: #{forward.8} parent=0 // pred_check
    _
  $region7: #{forward.8} parent=0 // pred_check_branch
    %69 = sbr.rel (0) target = $region9
  $region8: #{forward.8} parent=0 // pred_region
    _
  $region9: #{forward.8} parent=0 // pred_fallthru
    _
  // Predicated region
  $region10: #{forward.8} parent=0 // pred_check
    _
  $region11: #{forward.8} parent=0 // pred_check_branch
    %71 = sbr.rel (0) target = $region13
  $region12: #{forward.8} parent=0 // pred_region
    _
  $region13: #{forward.8} parent=0 // pred_fallthru
    _

// kernel: forward.9
$region0: #{forward.9}
  #allocation0 [shape = 'u32[]', space=smem, size = 0x4, offset = 0x4, fixed_abs, tag = 'smem constant byte address 0x4 - core index']
  #allocation1 [shape = 'u32[144,128]{1,0:T(1,128)}', space=vmem, size = 0x12000, scoped, tag = 'internal scratch']
  #allocation2 [shape = 'f32[8,128]{1,0:T(8,128)}', space=vmem, size = 0x1000, scoped, tag = 'scratch operand']
  %s0 = inlined_call_operand.vmem [shape: f32[8,512], index: 0, kind: input, shape index: {}]
  %s1 = inlined_call_operand.vmem [shape: f32[512,128], index: 1, kind: input, shape index: {}]
  %s2 = inlined_call_operand.vmem [shape: f32[1,128], index: 2, kind: input, shape index: {}]
  %s3 = inlined_call_operand.vmem [shape: f32[128,128], index: 3, kind: input, shape index: {}]
  %s4 = inlined_call_operand.vmem [shape: f32[1,128], index: 4, kind: input, shape index: {}]
  %s5 = inlined_call_operand.vmem [shape: f32[128,128], index: 5, kind: input, shape index: {}]
  %s6 = inlined_call_operand.vmem [shape: f32[1,128], index: 6, kind: input, shape index: {}]
  %s7 = inlined_call_operand.vmem [shape: f32[8,128], index: 7, kind: output, shape index: {}]
  %s8 = sld [smem:[#allocation0]]
  $region46: #{forward.9} parent=0
    _
  %s10 = ssub.s32 1, %s8
  %s11 = scalar_select 0, %s10, %s8
  // Predicated region
  $region2: #{forward.9} parent=0 // pred_check
    _
  $region3: #{forward.9} parent=0 // pred_check_branch
    %13 = sbr.rel (0) target = $region5
  $region4: #{forward.9} parent=0 // pred_region
    _
  $region5: #{forward.9} parent=0 // pred_fallthru
    _
  // Predicated region
  $region6: #{forward.9} parent=0 // pred_check
    _
  $region7: #{forward.9} parent=0 // pred_check_branch
    %15 = sbr.rel (0) target = $region9
  $region8: #{forward.9} parent=0 // pred_region
    _
  $region9: #{forward.9} parent=0 // pred_fallthru
    _
  // Predicated region
  $region10: #{forward.9} parent=0 // pred_check
    _
  $region11: #{forward.9} parent=0 // pred_check_branch
    %17 = sbr.rel (0) target = $region13
  $region12: #{forward.9} parent=0 // pred_region
    _
  $region13: #{forward.9} parent=0 // pred_fallthru
    _
  // Predicated region
  $region14: #{forward.9} parent=0 // pred_check
    _
  $region15: #{forward.9} parent=0 // pred_check_branch
    %19 = sbr.rel (0) target = $region17
  $region16: #{forward.9} parent=0 // pred_region
    _
  $region17: #{forward.9} parent=0 // pred_fallthru
    _
  // Predicated region
  $region18: #{forward.9} parent=0 // pred_check
    _
  $region19: #{forward.9} parent=0 // pred_check_branch
    %21 = sbr.rel (0) target = $region21
  $region20: #{forward.9} parent=0 // pred_region
    _
  $region21: #{forward.9} parent=0 // pred_fallthru
    _
  // Predicated region
  $region22: #{forward.9} parent=0 // pred_check
    _
  $region23: #{forward.9} parent=0 // pred_check_branch
    %23 = sbr.rel (0) target = $region25
  $region24: #{forward.9} parent=0 // pred_region
    _
  $region25: #{forward.9} parent=0 // pred_fallthru
    _
  // Predicated region
  $region26: #{forward.9} parent=0 // pred_check
    _
  $region27: #{forward.9} parent=0 // pred_check_branch
    %25 = sbr.rel (0) target = $region29
  $region28: #{forward.9} parent=0 // pred_region
    _
  $region29: #{forward.9} parent=0 // pred_fallthru
    _
  %p26 = scmp.eq.s32.totalorder 0, 0
  // Predicated region
  $region30: #{forward.9} parent=0 // pred_check
    %p27 = pneg %p26
  $region31: #{forward.9} parent=0 // pred_check_branch
    %29 = sbr.rel (%p27) target = $region33
  $region32: #{forward.9} parent=0 // pred_region
    %30 = vst [vmem:[#allocation2] sm:$0xff] 0.0
  $region33: #{forward.9} parent=0 // pred_fallthru
    _
  %v31 = vld [vmem:[#allocation2] sm:$0xff]
  %v32 = vld [vmem:[%s0] sm:$0xff]
  %v33 = vld [vmem:[%s0 + $0x8] sm:$0xff]
  %v34 = vld [vmem:[%s0 + $0x10] sm:$0xff]
  %v35 = vld [vmem:[%s0 + $0x18] sm:$0xff]
  %v36 = vld [vmem:[%s1] sm:$0xff]
  %v37 = vld [vmem:[%s1 + $0x8] sm:$0xff]
  %v38 = vld [vmem:[%s1 + $0x10] sm:$0xff]
  %v39 = vld [vmem:[%s1 + $0x18] sm:$0xff]
  %v40 = vld [vmem:[%s1 + $0x20] sm:$0xff]
  %v41 = vld [vmem:[%s1 + $0x28] sm:$0xff]
  %v42 = vld [vmem:[%s1 + $0x30] sm:$0xff]
  %v43 = vld [vmem:[%s1 + $0x38] sm:$0xff]
  %v44 = vld [vmem:[%s1 + $0x40] sm:$0xff]
  %v45 = vld [vmem:[%s1 + $0x48] sm:$0xff]
  %v46 = vld [vmem:[%s1 + $0x50] sm:$0xff]
  %v47 = vld [vmem:[%s1 + $0x58] sm:$0xff]
  %v48 = vld [vmem:[%s1 + $0x60] sm:$0xff]
  %v49 = vld [vmem:[%s1 + $0x68] sm:$0xff]
  %v50 = vld [vmem:[%s1 + $0x70] sm:$0xff]
  %v51 = vld [vmem:[%s1 + $0x78] sm:$0xff]
  %v52 = vld [vmem:[%s1 + $0x80] sm:$0xff]
  %v53 = vld [vmem:[%s1 + $0x88] sm:$0xff]
  %v54 = vld [vmem:[%s1 + $0x90] sm:$0xff]
  %v55 = vld [vmem:[%s1 + $0x98] sm:$0xff]
  %v56 = vld [vmem:[%s1 + $0xa0] sm:$0xff]
  %v57 = vld [vmem:[%s1 + $0xa8] sm:$0xff]
  %v58 = vld [vmem:[%s1 + $0xb0] sm:$0xff]
  %v59 = vld [vmem:[%s1 + $0xb8] sm:$0xff]
  %v60 = vld [vmem:[%s1 + $0xc0] sm:$0xff]
  %v61 = vld [vmem:[%s1 + $0xc8] sm:$0xff]
  %v62 = vld [vmem:[%s1 + $0xd0] sm:$0xff]
  %v63 = vld [vmem:[%s1 + $0xd8] sm:$0xff]
  %v64 = vld [vmem:[%s1 + $0xe0] sm:$0xff]
  %v65 = vld [vmem:[%s1 + $0xe8] sm:$0xff]
  %v66 = vld [vmem:[%s1 + $0xf0] sm:$0xff]
  %v67 = vld [vmem:[%s1 + $0xf8] sm:$0xff]
  %v68 = vld [vmem:[%s1 + $0x100] sm:$0xff]
  %v69 = vld [vmem:[%s1 + $0x108] sm:$0xff]
  %v70 = vld [vmem:[%s1 + $0x110] sm:$0xff]
  %v71 = vld [vmem:[%s1 + $0x118] sm:$0xff]
  %v72 = vld [vmem:[%s1 + $0x120] sm:$0xff]
  %v73 = vld [vmem:[%s1 + $0x128] sm:$0xff]
  %v74 = vld [vmem:[%s1 + $0x130] sm:$0xff]
  %v75 = vld [vmem:[%s1 + $0x138] sm:$0xff]
  %v76 = vld [vmem:[%s1 + $0x140] sm:$0xff]
  %v77 = vld [vmem:[%s1 + $0x148] sm:$0xff]
  %v78 = vld [vmem:[%s1 + $0x150] sm:$0xff]
  %v79 = vld [vmem:[%s1 + $0x158] sm:$0xff]
  %v80 = vld [vmem:[%s1 + $0x160] sm:$0xff]
  %v81 = vld [vmem:[%s1 + $0x168] sm:$0xff]
  %v82 = vld [vmem:[%s1 + $0x170] sm:$0xff]
  %v83 = vld [vmem:[%s1 + $0x178] sm:$0xff]
  %v84 = vld [vmem:[%s1 + $0x180] sm:$0xff]
  %v85 = vld [vmem:[%s1 + $0x188] sm:$0xff]
  %v86 = vld [vmem:[%s1 + $0x190] sm:$0xff]
  %v87 = vld [vmem:[%s1 + $0x198] sm:$0xff]
  %v88 = vld [vmem:[%s1 + $0x1a0] sm:$0xff]
  %v89 = vld [vmem:[%s1 + $0x1a8] sm:$0xff]
  %v90 = vld [vmem:[%s1 + $0x1b0] sm:$0xff]
  %v91 = vld [vmem:[%s1 + $0x1b8] sm:$0xff]
  %v92 = vld [vmem:[%s1 + $0x1c0] sm:$0xff]
  %v93 = vld [vmem:[%s1 + $0x1c8] sm:$0xff]
  %v94 = vld [vmem:[%s1 + $0x1d0] sm:$0xff]
  %v95 = vld [vmem:[%s1 + $0x1d8] sm:$0xff]
  %v96 = vld [vmem:[%s1 + $0x1e0] sm:$0xff]
  %v97 = vld [vmem:[%s1 + $0x1e8] sm:$0xff]
  %v98 = vld [vmem:[%s1 + $0x1f0] sm:$0xff]
  %v99 = vld [vmem:[%s1 + $0x1f8] sm:$0xff]
  %100 = vmatprep.subr.mxu0 0.0
  %101 = vmatpush1.msra.mxu0 %v36
  %102 = vmatprep.subr.mxu0 0.0
  %103 = vmatpush1.msra.mxu0 %v37
  %104 = vmatprep.subr.mxu0 0.0
  %105 = vmatpush1.msra.mxu0 %v38
  %106 = vmatprep.subr.mxu0 0.0
  %107 = vmatpush1.msra.mxu0 %v39
  %108 = vmatprep.subr.mxu0 0.0
  %109 = vmatpush1.msra.mxu0 %v40
  %110 = vmatprep.subr.mxu0 0.0
  %111 = vmatpush1.msra.mxu0 %v41
  %112 = vmatprep.subr.mxu0 0.0
  %113 = vmatpush1.msra.mxu0 %v42
  %114 = vmatprep.subr.mxu0 0.0
  %115 = vmatpush1.msra.mxu0 %v43
  %116 = vmatprep.subr.mxu0 0.0
  %117 = vmatpush1.msra.mxu0 %v44
  %118 = vmatprep.subr.mxu0 0.0
  %119 = vmatpush1.msra.mxu0 %v45
  %120 = vmatprep.subr.mxu0 0.0
  %121 = vmatpush1.msra.mxu0 %v46
  %122 = vmatprep.subr.mxu0 0.0
  %123 = vmatpush1.msra.mxu0 %v47
  %124 = vmatprep.subr.mxu0 0.0
  %125 = vmatpush1.msra.mxu0 %v48
  %126 = vmatprep.subr.mxu0 0.0
  %127 = vmatpush1.msra.mxu0 %v49
  %128 = vmatprep.subr.mxu0 0.0
  %129 = vmatpush1.msra.mxu0 %v50
  %130 = vmatprep.subr.mxu0 0.0
  %131 = vmatpush1.msra.mxu0 %v51
  %132 = vmatprep.subr.mxu0 0.0
  %133 = vmatpush1.msra.mxu0 %v52
  %134 = vmatprep.subr.mxu0 0.0
  %135 = vmatpush1.msra.mxu0 %v53
  %136 = vmatprep.subr.mxu0 0.0
  %137 = vmatpush1.msra.mxu0 %v54
  %138 = vmatprep.subr.mxu0 0.0
  %139 = vmatpush1.msra.mxu0 %v55
  %140 = vmatprep.subr.mxu0 0.0
  %141 = vmatpush1.msra.mxu0 %v56
  %142 = vmatprep.subr.mxu0 0.0
  %143 = vmatpush1.msra.mxu0 %v57
  %144 = vmatprep.subr.mxu0 0.0
  %145 = vmatpush1.msra.mxu0 %v58
  %146 = vmatprep.subr.mxu0 0.0
  %147 = vmatpush1.msra.mxu0 %v59
  %148 = vmatprep.subr.mxu0 0.0
  %149 = vmatpush1.msra.mxu0 %v60
  %150 = vmatprep.subr.mxu0 0.0
  %151 = vmatpush1.msra.mxu0 %v61
  %152 = vmatprep.subr.mxu0 0.0
  %153 = vmatpush1.msra.mxu0 %v62
  %154 = vmatprep.subr.mxu0 0.0
  %155 = vmatpush1.msra.mxu0 %v63
  %156 = vmatprep.subr.mxu0 0.0
  %157 = vmatpush1.msra.mxu0 %v64
  %158 = vmatprep.subr.mxu0 0.0
  %159 = vmatpush1.msra.mxu0 %v65
  %160 = vmatprep.subr.mxu0 0.0
  %161 = vmatpush1.msra.mxu0 %v66
  %162 = vmatprep.subr.mxu0 0.0
  %163 = vmatpush1.msra.mxu0 %v67
  %164 = vmatprep.mubr.f32.mxu0 %v33
  %165 = vmatmul.mubr.f32.gmra.mrb[0].mxu0 %v32
  %v166 = vpop.f32.mrb[0].mxu0
  %v167 = vadd.f32 0.0, %v166
  %v168 = vpop.f32.mrb[0].mxu0
  %169 = vdwg.mxu0
  %170 = vmatprep.subr.mxu0 0.0
  %171 = vmatpush1.msra.mxu0 %v68
  %172 = vmatprep.subr.mxu0 0.0
  %173 = vmatpush1.msra.mxu0 %v69
  %174 = vmatprep.subr.mxu0 0.0
  %175 = vmatpush1.msra.mxu0 %v70
  %176 = vmatprep.subr.mxu0 0.0
  %177 = vmatpush1.msra.mxu0 %v71
  %178 = vmatprep.subr.mxu0 0.0
  %179 = vmatpush1.msra.mxu0 %v72
  %180 = vmatprep.subr.mxu0 0.0
  %181 = vmatpush1.msra.mxu0 %v73
  %182 = vmatprep.subr.mxu0 0.0
  %183 = vmatpush1.msra.mxu0 %v74
  %184 = vmatprep.subr.mxu0 0.0
  %185 = vmatpush1.msra.mxu0 %v75
  %186 = vmatprep.subr.mxu0 0.0
  %187 = vmatpush1.msra.mxu0 %v76
  %188 = vmatprep.subr.mxu0 0.0
  %189 = vmatpush1.msra.mxu0 %v77
  %190 = vmatprep.subr.mxu0 0.0
  %191 = vmatpush1.msra.mxu0 %v78
  %192 = vmatprep.subr.mxu0 0.0
  %193 = vmatpush1.msra.mxu0 %v79
  %194 = vmatprep.subr.mxu0 0.0
  %195 = vmatpush1.msra.mxu0 %v80
  %196 = vmatprep.subr.mxu0 0.0
  %197 = vmatpush1.msra.mxu0 %v81
  %198 = vmatprep.subr.mxu0 0.0
  %199 = vmatpush1.msra.mxu0 %v82
  %200 = vmatprep.subr.mxu0 0.0
  %201 = vmatpush1.msra.mxu0 %v83
  %202 = vmatprep.subr.mxu0 0.0
  %203 = vmatpush1.msra.mxu0 %v84
  %204 = vmatprep.subr.mxu0 0.0
  %205 = vmatpush1.msra.mxu0 %v85
  %206 = vmatprep.subr.mxu0 0.0
  %207 = vmatpush1.msra.mxu0 %v86
  %208 = vmatprep.subr.mxu0 0.0
  %209 = vmatpush1.msra.mxu0 %v87
  %210 = vmatprep.subr.mxu0 0.0
  %211 = vmatpush1.msra.mxu0 %v88
  %212 = vmatprep.subr.mxu0 0.0
  %213 = vmatpush1.msra.mxu0 %v89
  %214 = vmatprep.subr.mxu0 0.0
  %215 = vmatpush1.msra.mxu0 %v90
  %216 = vmatprep.subr.mxu0 0.0
  %217 = vmatpush1.msra.mxu0 %v91
  %218 = vmatprep.subr.mxu0 0.0
  %219 = vmatpush1.msra.mxu0 %v92
  %220 = vmatprep.subr.mxu0 0.0
  %221 = vmatpush1.msra.mxu0 %v93
  %222 = vmatprep.subr.mxu0 0.0
  %223 = vmatpush1.msra.mxu0 %v94
  %224 = vmatprep.subr.mxu0 0.0
  %225 = vmatpush1.msra.mxu0 %v95
  %226 = vmatprep.subr.mxu0 0.0
  %227 = vmatpush1.msra.mxu0 %v96
  %228 = vmatprep.subr.mxu0 0.0
  %229 = vmatpush1.msra.mxu0 %v97
  %230 = vmatprep.subr.mxu0 0.0
  %231 = vmatpush1.msra.mxu0 %v98
  %232 = vmatprep.subr.mxu0 0.0
  %233 = vmatpush1.msra.mxu0 %v99
  %234 = vmatprep.mubr.f32.mxu0 %v35
  %235 = vmatmul.mubr.f32.gmra.mrb[0].mxu0 %v34
  %v236 = vpop.f32.mrb[0].mxu0
  %v237 = vadd.f32 %v167, %v236
  %v238 = vpop.f32.mrb[0].mxu0
  %239 = vdwg.mxu0
  %v240 = vadd.f32 %v31, %v237
  %241 = vst [vmem:[#allocation2] sm:$0xff] %v240
  // Predicated region
  $region34: #{forward.9} parent=0 // pred_check
    %p242 = pneg %p26
  $region35: #{forward.9} parent=0 // pred_check_branch
    %244 = sbr.rel (%p242) target = $region37
  $region36: #{forward.9} parent=0 // pred_region
    %v245 = vld [vmem:[#allocation2] sm:$0xff]
    %v246 = vld [vmem:[%s2] sm:$0x1]
    %v248 = vlaneseq
    %v249 = vshrl.u32 %v248, 7
    %v250 = vsub.s32 0, %v249
    %v251 = vrot.slane %v246, %v250
    %v253 = vadd.f32 %v245, %v251
    %vm254 = vcmp.ge.f32.partialorder %v253, 0.0
    %v255 = vmul.f32 %v253, 0.01
    %v256 = vsel %vm254, %v253, %v255
    %v257 = vld [vmem:[%s3] sm:$0xff]
    %v258 = vld [vmem:[%s3 + $0x8] sm:$0xff]
    %v259 = vld [vmem:[%s3 + $0x10] sm:$0xff]
    %v260 = vld [vmem:[%s3 + $0x18] sm:$0xff]
    %v261 = vld [vmem:[%s3 + $0x20] sm:$0xff]
    %v262 = vld [vmem:[%s3 + $0x28] sm:$0xff]
    %v263 = vld [vmem:[%s3 + $0x30] sm:$0xff]
    %v264 = vld [vmem:[%s3 + $0x38] sm:$0xff]
    %v265 = vld [vmem:[%s3 + $0x40] sm:$0xff]
    %v266 = vld [vmem:[%s3 + $0x48] sm:$0xff]
    %v267 = vld [vmem:[%s3 + $0x50] sm:$0xff]
    %v268 = vld [vmem:[%s3 + $0x58] sm:$0xff]
    %v269 = vld [vmem:[%s3 + $0x60] sm:$0xff]
    %v270 = vld [vmem:[%s3 + $0x68] sm:$0xff]
    %v271 = vld [vmem:[%s3 + $0x70] sm:$0xff]
    %v272 = vld [vmem:[%s3 + $0x78] sm:$0xff]
    %v273 = vld [vmem:[%s4] sm:$0x1]
    %v275 = vlaneseq
    %v276 = vshrl.u32 %v275, 7
    %v277 = vsub.s32 0, %v276
    %v278 = vrot.slane %v273, %v277
    %280 = vmatprep.subr.mxu0 0.0
    %281 = vmatpush1.msra.mxu0 %v257
    %282 = vmatprep.subr.mxu0 0.0
    %283 = vmatpush1.msra.mxu0 %v258
    %284 = vmatprep.subr.mxu0 0.0
    %285 = vmatpush1.msra.mxu0 %v259
    %286 = vmatprep.subr.mxu0 0.0
    %287 = vmatpush1.msra.mxu0 %v260
    %288 = vmatprep.subr.mxu0 0.0
    %289 = vmatpush1.msra.mxu0 %v261
    %290 = vmatprep.subr.mxu0 0.0
    %291 = vmatpush1.msra.mxu0 %v262
    %292 = vmatprep.subr.mxu0 0.0
    %293 = vmatpush1.msra.mxu0 %v263
    %294 = vmatprep.subr.mxu0 0.0
    %295 = vmatpush1.msra.mxu0 %v264
    %296 = vmatprep.subr.mxu0 0.0
    %297 = vmatpush1.msra.mxu0 %v265
    %298 = vmatprep.subr.mxu0 0.0
    %299 = vmatpush1.msra.mxu0 %v266
    %300 = vmatprep.subr.mxu0 0.0
    %301 = vmatpush1.msra.mxu0 %v267
    %302 = vmatprep.subr.mxu0 0.0
    %303 = vmatpush1.msra.mxu0 %v268
    %304 = vmatprep.subr.mxu0 0.0
    %305 = vmatpush1.msra.mxu0 %v269
    %306 = vmatprep.subr.mxu0 0.0
    %307 = vmatpush1.msra.mxu0 %v270
    %308 = vmatprep.subr.mxu0 0.0
    %309 = vmatpush1.msra.mxu0 %v271
    %310 = vmatprep.subr.mxu0 0.0
    %311 = vmatpush1.msra.mxu0 %v272
    %312 = vmatprep.subr.mxu0 0.0
    %313 = vmatpush1.msra.mxu0 0.0
    %314 = vmatprep.subr.mxu0 0.0
    %315 = vmatpush1.msra.mxu0 0.0
    %316 = vmatprep.subr.mxu0 0.0
    %317 = vmatpush1.msra.mxu0 0.0
    %318 = vmatprep.subr.mxu0 0.0
    %319 = vmatpush1.msra.mxu0 0.0
    %320 = vmatprep.subr.mxu0 0.0
    %321 = vmatpush1.msra.mxu0 0.0
    %322 = vmatprep.subr.mxu0 0.0
    %323 = vmatpush1.msra.mxu0 0.0
    %324 = vmatprep.subr.mxu0 0.0
    %325 = vmatpush1.msra.mxu0 0.0
    %326 = vmatprep.subr.mxu0 0.0
    %327 = vmatpush1.msra.mxu0 0.0
    %328 = vmatprep.subr.mxu0 0.0
    %329 = vmatpush1.msra.mxu0 0.0
    %330 = vmatprep.subr.mxu0 0.0
    %331 = vmatpush1.msra.mxu0 0.0
    %332 = vmatprep.subr.mxu0 0.0
    %333 = vmatpush1.msra.mxu0 0.0
    %334 = vmatprep.subr.mxu0 0.0
    %335 = vmatpush1.msra.mxu0 0.0
    %336 = vmatprep.subr.mxu0 0.0
    %337 = vmatpush1.msra.mxu0 0.0
    %338 = vmatprep.subr.mxu0 0.0
    %339 = vmatpush1.msra.mxu0 0.0
    %340 = vmatprep.subr.mxu0 0.0
    %341 = vmatpush1.msra.mxu0 0.0
    %342 = vmatprep.subr.mxu0 0.0
    %343 = vmatpush1.msra.mxu0 0.0
    %344 = vmatprep.mubr.f32.mxu0 0.0
    %345 = vmatmul.mubr.f32.gmra.mrb[0].mxu0 %v256
    %v346 = vpop.f32.mrb[0].mxu0
    %v347 = vadd.f32 %v278, %v346
    %v348 = vpop.f32.mrb[0].mxu0
    %349 = vdwg.mxu0
    %vm350 = vcmp.ge.f32.partialorder %v347, 0.0
    %v351 = vmul.f32 %v347, 0.01
    %v352 = vsel %vm350, %v347, %v351
    %v353 = vld [vmem:[%s5] sm:$0xff]
    %v354 = vld [vmem:[%s5 + $0x8] sm:$0xff]
    %v355 = vld [vmem:[%s5 + $0x10] sm:$0xff]
    %v356 = vld [vmem:[%s5 + $0x18] sm:$0xff]
    %v357 = vld [vmem:[%s5 + $0x20] sm:$0xff]
    %v358 = vld [vmem:[%s5 + $0x28] sm:$0xff]
    %v359 = vld [vmem:[%s5 + $0x30] sm:$0xff]
    %v360 = vld [vmem:[%s5 + $0x38] sm:$0xff]
    %v361 = vld [vmem:[%s5 + $0x40] sm:$0xff]
    %v362 = vld [vmem:[%s5 + $0x48] sm:$0xff]
    %v363 = vld [vmem:[%s5 + $0x50] sm:$0xff]
    %v364 = vld [vmem:[%s5 + $0x58] sm:$0xff]
    %v365 = vld [vmem:[%s5 + $0x60] sm:$0xff]
    %v366 = vld [vmem:[%s5 + $0x68] sm:$0xff]
    %v367 = vld [vmem:[%s5 + $0x70] sm:$0xff]
    %v368 = vld [vmem:[%s5 + $0x78] sm:$0xff]
    %v369 = vld [vmem:[%s6] sm:$0x1]
    %v371 = vlaneseq
    %v372 = vshrl.u32 %v371, 7
    %v373 = vsub.s32 0, %v372
    %v374 = vrot.slane %v369, %v373
    %376 = vmatprep.subr.mxu0 0.0
    %377 = vmatpush1.msra.mxu0 %v353
    %378 = vmatprep.subr.mxu0 0.0
    %379 = vmatpush1.msra.mxu0 %v354
    %380 = vmatprep.subr.mxu0 0.0
    %381 = vmatpush1.msra.mxu0 %v355
    %382 = vmatprep.subr.mxu0 0.0
    %383 = vmatpush1.msra.mxu0 %v356
    %384 = vmatprep.subr.mxu0 0.0
    %385 = vmatpush1.msra.mxu0 %v357
    %386 = vmatprep.subr.mxu0 0.0
    %387 = vmatpush1.msra.mxu0 %v358
    %388 = vmatprep.subr.mxu0 0.0
    %389 = vmatpush1.msra.mxu0 %v359
    %390 = vmatprep.subr.mxu0 0.0
    %391 = vmatpush1.msra.mxu0 %v360
    %392 = vmatprep.subr.mxu0 0.0
    %393 = vmatpush1.msra.mxu0 %v361
    %394 = vmatprep.subr.mxu0 0.0
    %395 = vmatpush1.msra.mxu0 %v362
    %396 = vmatprep.subr.mxu0 0.0
    %397 = vmatpush1.msra.mxu0 %v363
    %398 = vmatprep.subr.mxu0 0.0
    %399 = vmatpush1.msra.mxu0 %v364
    %400 = vmatprep.subr.mxu0 0.0
    %401 = vmatpush1.msra.mxu0 %v365
    %402 = vmatprep.subr.mxu0 0.0
    %403 = vmatpush1.msra.mxu0 %v366
    %404 = vmatprep.subr.mxu0 0.0
    %405 = vmatpush1.msra.mxu0 %v367
    %406 = vmatprep.subr.mxu0 0.0
    %407 = vmatpush1.msra.mxu0 %v368
    %408 = vmatprep.subr.mxu0 0.0
    %409 = vmatpush1.msra.mxu0 0.0
    %410 = vmatprep.subr.mxu0 0.0
    %411 = vmatpush1.msra.mxu0 0.0
    %412 = vmatprep.subr.mxu0 0.0
    %413 = vmatpush1.msra.mxu0 0.0
    %414 = vmatprep.subr.mxu0 0.0
    %415 = vmatpush1.msra.mxu0 0.0
    %416 = vmatprep.subr.mxu0 0.0
    %417 = vmatpush1.msra.mxu0 0.0
    %418 = vmatprep.subr.mxu0 0.0
    %419 = vmatpush1.msra.mxu0 0.0
    %420 = vmatprep.subr.mxu0 0.0
    %421 = vmatpush1.msra.mxu0 0.0
    %422 = vmatprep.subr.mxu0 0.0
    %423 = vmatpush1.msra.mxu0 0.0
    %424 = vmatprep.subr.mxu0 0.0
    %425 = vmatpush1.msra.mxu0 0.0
    %426 = vmatprep.subr.mxu0 0.0
    %427 = vmatpush1.msra.mxu0 0.0
    %428 = vmatprep.subr.mxu0 0.0
    %429 = vmatpush1.msra.mxu0 0.0
    %430 = vmatprep.subr.mxu0 0.0
    %431 = vmatpush1.msra.mxu0 0.0
    %432 = vmatprep.subr.mxu0 0.0
    %433 = vmatpush1.msra.mxu0 0.0
    %434 = vmatprep.subr.mxu0 0.0
    %435 = vmatpush1.msra.mxu0 0.0
    %436 = vmatprep.subr.mxu0 0.0
    %437 = vmatpush1.msra.mxu0 0.0
    %438 = vmatprep.subr.mxu0 0.0
    %439 = vmatpush1.msra.mxu0 0.0
    %440 = vmatprep.mubr.f32.mxu0 0.0
    %441 = vmatmul.mubr.f32.gmra.mrb[0].mxu0 %v352
    %v442 = vpop.f32.mrb[0].mxu0
    %v443 = vadd.f32 %v374, %v442
    %v444 = vpop.f32.mrb[0].mxu0
    %445 = vdwg.mxu0
    %v446 = vlaneseq
    %v447 = vand.u32 %v446, 127
    %vm448 = vcmp.lt.s32.totalorder %v447, 7
    %v449 = vsel %vm448, %v443, -1e+30
    %450 = vmax.xlane.f32.xlu0 %v449
    %v451 = vpop.xlane.xlu0 %450
    %v452 = vsub.f32 %v449, %v451
    %v453 = vmul.f32 %v452, 1.442695
    %v454 = vpow.pop %v453
    %455 = vadd.xlane.f32.xlu0 %v454
    %v456 = vpop.xlane.xlu0 %455
    %v457 = vlog2.pop %v456
    %v458 = vmul.f32 %v457, 0.6931472
    %v459 = vadd.f32 %v458, %v451
    %v460 = vsub.f32 %v449, %v459
    %461 = vst [vmem:[%s7] sm:$0xff] %v460
  $region37: #{forward.9} parent=0 // pred_fallthru
    _
  // Predicated region
  $region38: #{forward.9} parent=0 // pred_check
    _
  $region39: #{forward.9} parent=0 // pred_check_branch
    %463 = sbr.rel (0) target = $region41
  $region40: #{forward.9} parent=0 // pred_region
    _
  $region41: #{forward.9} parent=0 // pred_fallthru
    _
  // Predicated region
  $region42: #{forward.9} parent=0 // pred_check
    _
  $region43: #{forward.9} parent=0 // pred_check_branch
    %465 = sbr.rel (0) target = $region45
  $region44: #{forward.9} parent=0 // pred_region
    _
  $region45: #{forward.9} parent=0 // pred_fallthru
    _

</llo_original>
